<compile_context>
chip_gen: v7x
topology: tpu7x:2x2x1
jax: 0.10.0
libtpu: 0.0.40
codegen_flags: <defaults>
</compile_context>

<pallas_src>
import functools

import jax
import jax.numpy as jnp
from jax.experimental import pallas as pl
from jax.experimental.pallas import tpu as pltpu


# ----------------------------------------------------------------------------
# Hardware-aware configuration helpers
# ----------------------------------------------------------------------------
@functools.lru_cache(maxsize=None)
def _vmem_limit_bytes():
    """~7/8 of the chip's physical VMEM (leaves headroom for compiler scratch)."""
    try:
        cap = pltpu.get_tpu_info().vmem_capacity_bytes
    except Exception:
        cap = 64 * 1024 * 1024            # conservative: v7x per-TC VMEM
    return max(32 * 1024 * 1024, (cap * 7) // 8)


@functools.lru_cache(maxsize=None)
def _num_tensorcores():
    """Megacore chips (v4 / v5p / v7x) expose 2 TensorCores behind one device."""
    try:
        kind = jax.devices()[0].device_kind.lower()
    except Exception:
        return 1
    return 2 if ("v7" in kind or "v4" in kind or "v5p" in kind) else 1


@functools.lru_cache(maxsize=None)
def _compiler_params():
    return pltpu.CompilerParams(
        dimension_semantics=("parallel",),
        vmem_limit_bytes=_vmem_limit_bytes(),
    )


@functools.lru_cache(maxsize=None)
def _weight_pipeline_mode():
    """pl.Buffered(1) for constant-index weight inputs if supported, else None.

    Constant index_map weights gain nothing from double buffering; single
    buffering halves their VMEM footprint.  Probed once with a micro kernel so
    we never break compilation on runtimes without pipeline_mode support.
    """
    try:
        def k(x_ref, w_ref, o_ref):
            o_ref[...] = x_ref[...] + w_ref[...]

        f = pl.pallas_call(
            k,
            grid=(2,),
            in_specs=[
                pl.BlockSpec((8, 128), lambda i: (i, 0)),
                pl.BlockSpec((8, 128), lambda i: (0, 0),
                             pipeline_mode=pl.Buffered(1)),
            ],
            out_specs=pl.BlockSpec((8, 128), lambda i: (i, 0)),
            out_shape=jax.ShapeDtypeStruct((16, 128), jnp.float32),
        )
        jax.block_until_ready(f(jnp.zeros((16, 128), jnp.float32),
                                jnp.ones((8, 128), jnp.float32)))
        return pl.Buffered(1)
    except Exception:
        return None


def _wspec(shape):
    """BlockSpec for a weight that is identical on every grid step."""
    pm = _weight_pipeline_mode()
    if pm is None:
        return pl.BlockSpec(shape, lambda *i: (0,) * len(shape))
    return pl.BlockSpec(shape, lambda *i: (0,) * len(shape), pipeline_mode=pm)


def _batch_tile(n, rows_per_elem, bytes_per_row, weight_bytes, multiple_of=1):
    """Pick a batch tile.

    Biggest tile whose streamed (double-buffered) blocks + resident weights fit
    the VMEM budget; on megacore chips the grid (= n // tile) is kept a nonzero
    multiple of the TensorCore count so the "parallel" axis shards both cores.
    """
    cores = _num_tensorcores()
    n_buf = 1 if _weight_pipeline_mode() is not None else 2
    budget = max(2 * 1024 * 1024,
                 _vmem_limit_bytes() - n_buf * weight_bytes - 8 * 1024 * 1024)
    max_rows = max(rows_per_elem, (budget // 2) // max(1, bytes_per_row))
    divs = [d for d in range(1, n + 1) if n % d == 0 and d % multiple_of == 0]
    if not divs:
        return n
    if cores > 1:
        good = [d for d in divs if d < n and (n // d) % cores == 0]
        if good:
            divs = good
    fits = [d for d in divs if d * rows_per_elem <= max_rows]
    return (fits or divs[:1])[-1]


# ----------------------------------------------------------------------------
# mapping Linear + GELU
# ----------------------------------------------------------------------------
_MIN_PALLAS_ROWS = 256   # below this the pallas_call is pure launch/DMA overhead


def _linear_gelu_kernel(x_ref, w_ref, b_ref, o_ref):
    y = (jnp.dot(x_ref[...], w_ref[...], preferred_element_type=jnp.float32)
         + b_ref[...])
    # TODO(synk): HF BERT default GELU is exact (erf); tanh-approx used here.
    o_ref[...] = jax.nn.gelu(y, approximate=True).astype(o_ref.dtype)


def linear_gelu(x, w, b):
    """mapping + activation.  XLA for small row counts, Pallas (M-tiled,
    megacore-parallel) for large ones."""
    M, K = x.shape
    Nout = w.shape[1]
    if M < _MIN_PALLAS_ROWS or M % 8 != 0:
        y = x.astype(jnp.float32) @ w.astype(jnp.float32) + b
        return jax.nn.gelu(y, approximate=True).astype(jnp.bfloat16)

    weight_bytes = K * Nout * 2 + Nout * 4
    row_bytes = 2 * (K + Nout) + 4 * Nout
    tm = _batch_tile(M, 1, row_bytes, weight_bytes, multiple_of=8)
    return pl.pallas_call(
        _linear_gelu_kernel,
        grid=(M // tm,),
        in_specs=[
            pl.BlockSpec((tm, K), lambda i: (i, 0)),
            _wspec((K, Nout)),
            _wspec((1, Nout)),
        ],
        out_specs=pl.BlockSpec((tm, Nout), lambda i: (i, 0)),
        out_shape=jax.ShapeDtypeStruct((M, Nout), jnp.bfloat16),
        compiler_params=_compiler_params(),
    )(x.astype(jnp.bfloat16), w, b.reshape(1, Nout))


# ----------------------------------------------------------------------------
# Transformer encoder layer kernel (stand-in for trans_encoder.encoder).
# One grid step per batch tile; dense projections as (B*L, H) GEMMs.
# ----------------------------------------------------------------------------
def _encoder_layer_kernel(
    x_ref, am_ref,
    wqkv_ref, bqkv_ref, wo_ref, w1_ref, b1_ref, w2_ref, vecs_ref,
    o_ref,
):
    B, L, H = x_ref.shape
    x2 = x_ref[...].reshape(B * L, H)       # (B*L, H) bf16
    amask = am_ref[...]                     # (B, 1, L) f32, 1.0 = attend

    vecs = vecs_ref[...]                    # (6, H) f32
    bo, ln1_g, ln1_b = vecs[0], vecs[1], vecs[2]
    b2, ln2_g, ln2_b = vecs[3], vecs[4], vecs[5]

    # Fused QKV: one wide GEMM over all B*L rows; cast to bf16 right after the
    # bias add so only a bf16 (B*L, 3H) intermediate stays live.
    qkv = (jnp.dot(x2, wqkv_ref[...], preferred_element_type=jnp.float32)
           + bqkv_ref[...]).astype(jnp.bfloat16)                # (B*L, 3H)
    q = qkv[:, 0:H].reshape(B, L, H)
    k = qkv[:, H:2 * H].reshape(B, L, H)
    v = qkv[:, 2 * H:3 * H].reshape(B, L, H)

    # TODO(synk): single-head attention stand-in (scale 1/sqrt(H)) for the
    # external pretrained multi-layer / multi-head BERT encoder.
    scores = jnp.einsum('bqd,bkd->bqk', q, k,
                        preferred_element_type=jnp.float32) * (1.0 / (H ** 0.5))
    scores = scores + (amask - 1.0) * 1e9           # mask padded keys
    scores = scores - jnp.max(scores, axis=-1, keepdims=True)
    p = jnp.exp(scores)
    attn = (p * pl.reciprocal(jnp.sum(p, axis=-1, keepdims=True),
                              approx=True)).astype(jnp.bfloat16)
    ctx = jnp.einsum('bqk,bkd->bqd', attn, v,
                     preferred_element_type=jnp.float32)        # (B, L, H) f32
    ctx2 = ctx.reshape(B * L, H).astype(jnp.bfloat16)

    h = (x2.astype(jnp.float32)
         + jnp.dot(ctx2, wo_ref[...], preferred_element_type=jnp.float32)
         + bo)
    mu = jnp.mean(h, axis=-1, keepdims=True)
    var = jnp.mean((h - mu) ** 2, axis=-1, keepdims=True)
    h = (h - mu) * jax.lax.rsqrt(var + 1e-12) * ln1_g + ln1_b   # (B*L, H) f32

    hb = h.astype(jnp.bfloat16)
    f = (jnp.dot(hb, w1_ref[...], preferred_element_type=jnp.float32)
         + b1_ref[...])
    f = jax.nn.gelu(f, approximate=True).astype(jnp.bfloat16)   # cap f32 FF slab
    f = jnp.dot(f, w2_ref[...], preferred_element_type=jnp.float32) + b2
    h2 = h + f
    mu2 = jnp.mean(h2, axis=-1, keepdims=True)
    var2 = jnp.mean((h2 - mu2) ** 2, axis=-1, keepdims=True)
    out = (h2 - mu2) * jax.lax.rsqrt(var2 + 1e-12) * ln2_g + ln2_b
    o_ref[...] = out.reshape(B, L, H).astype(o_ref.dtype)


def pallas_encoder_layer(x, attention_mask, lp, batch_tile=None):
    N, L, H = x.shape
    FF = lp["w1"].shape[1]
    if batch_tile is None:
        weight_bytes = 2 * (3 * H * H + H * H + 2 * H * FF) + 4 * (3 * H + FF + 6 * H)
        row_bytes = 4 * (3 * H + 2 * H + FF + L) + 2 * (2 * H + 3 * H + FF)
        batch_tile = _batch_tile(N, L, row_bytes, weight_bytes)
    bt = batch_tile
    assert N % bt == 0

    return pl.pallas_call(
        _encoder_layer_kernel,
        grid=(N // bt,),
        in_specs=[
            pl.BlockSpec((bt, 1, L), lambda i: (i, 0, 0)),       # placeholder, replaced below
        ][:0] + [
            pl.BlockSpec((bt, L, H), lambda i: (i, 0, 0)),
            pl.BlockSpec((bt, 1, L), lambda i: (i, 0, 0)),
            _wspec((H, 3 * H)),       # wqkv (bf16)
            _wspec((1, 3 * H)),       # bqkv (f32)
            _wspec((H, H)),           # wo   (bf16)
            _wspec((H, FF)),          # w1   (bf16)
            _wspec((1, FF)),          # b1   (f32)
            _wspec((FF, H)),          # w2   (bf16)
            _wspec((6, H)),           # [bo, ln1_g, ln1_b, b2, ln2_g, ln2_b] (f32)
        ],
        out_specs=pl.BlockSpec((bt, L, H), lambda i: (i, 0, 0)),
        out_shape=jax.ShapeDtypeStruct((N, L, H), jnp.bfloat16),
        compiler_params=_compiler_params(),
    )(
        x,
        attention_mask.astype(jnp.float32).reshape(N, 1, L),
        lp["wqkv"], lp["bqkv"], lp["wo"], lp["w1"], lp["b1"], lp["w2"],
        lp["vecs"],
    )


# ----------------------------------------------------------------------------
# MultiheadAttPool ("pooler_qagnn") kernel: query=feat, keys/values=last_hidden.
# Scores computed with ONE lane-dense (B*L, H) x (H, NH) GEMM; head-broadcast
# of the attention weights with a tiny (B*L, NH) x (NH, H) GEMM.  The unused
# pool_attn output is intentionally not materialized (dead in the forward).
# ----------------------------------------------------------------------------
def _pooler_kernel(
    q_ref, k_ref, m_ref,
    wq_ref, wk_ref, wv_ref, bvec_ref, gh_ref, gt_ref,
    out_ref, *, scale,
):
    B, L, H = k_ref.shape
    NH = gh_ref.shape[1]
    q2 = q_ref[...][:, 0, :]                 # (B, F) bf16
    k2 = k_ref[...].reshape(B * L, H)        # (B*L, H) bf16
    mask = m_ref[...]                        # (B, L, 1) f32, 1.0 = masked out
    bvec = bvec_ref[...]                     # (3, H) f32: [bq, bk, bv]
    gh = gh_ref[...]                         # (H, NH) bf16 one-hot head(d)
    gt = gt_ref[...]                         # (NH, H) bf16 one-hot

    qs = (jnp.dot(q2, wq_ref[...], preferred_element_type=jnp.float32)
          + bvec[0])                                             # (B, H) f32
    ks = (jnp.dot(k2, wk_ref[...], preferred_element_type=jnp.float32)
          + bvec[1]).reshape(B, L, H)
    vs = (jnp.dot(k2, wv_ref[...], preferred_element_type=jnp.float32)
          + bvec[2]).reshape(B, L, H)

    # scores[b,l,h] = scale * sum_{d in head h} qs[b,d] * ks[b,l,d]
    prod = (ks * (qs * scale)[:, None, :]).astype(jnp.bfloat16)  # (B, L, H)
    scores = jnp.dot(prod.reshape(B * L, H), gh,
                     preferred_element_type=jnp.float32).reshape(B, L, NH)
    # TODO(synk): additive -1e9 mask instead of masked_fill(-inf); differs from
    # PyTorch only when an entire row is masked.
    scores = scores - mask * 1e9                   # mask broadcasts over heads
    scores = scores - jnp.max(scores, axis=1, keepdims=True)     # softmax over L
    p = jnp.exp(scores)
    attn = p * pl.reciprocal(jnp.sum(p, axis=1, keepdims=True),
                             approx=True)                         # (B, L, NH)

    # w[b,l,d] = attn[b,l,head(d)]  -> weighted sum over L gives pooled output.
    w = jnp.dot(attn.reshape(B * L, NH).astype(jnp.bfloat16), gt,
                preferred_element_type=jnp.float32).reshape(B, L, H)
    pooled = jnp.sum(w * vs, axis=1)                              # (B, H) f32
    out_ref[...] = pooled[:, None, :].astype(out_ref.dtype)


def pallas_att_pool(feat, hidden, mask, pp, n_head, batch_tile=None):
    N, L, H = hidden.shape
    F = feat.shape[1]
    d_k = H // n_head
    if batch_tile is None:
        weight_bytes = 2 * (F * H + 2 * H * H + 2 * n_head * H) + 4 * 3 * H
        row_bytes = 4 * 3 * H + 2 * 2 * H + 4 * 2 * n_head
        batch_tile = _batch_tile(N, L, row_bytes, weight_bytes)
    bt = batch_tile
    assert N % bt == 0
    kernel = functools.partial(_pooler_kernel, scale=1.0 / (d_k ** 0.5))

    pooled = pl.pallas_call(
        kernel,
        grid=(N // bt,),
        in_specs=[
            pl.BlockSpec((bt, 1, F), lambda i: (i, 0, 0)),
            pl.BlockSpec((bt, L, H), lambda i: (i, 0, 0)),
            pl.BlockSpec((bt, L, 1), lambda i: (i, 0, 0)),
            _wspec((F, H)), _wspec((H, H)), _wspec((H, H)),
            _wspec((3, H)),              # [bq, bk, bv] (f32)
            _wspec((H, n_head)),         # GH one-hot (bf16)
            _wspec((n_head, H)),         # GT one-hot (bf16)
        ],
        out_specs=pl.BlockSpec((bt, 1, H), lambda i: (i, 0, 0)),
        out_shape=jax.ShapeDtypeStruct((N, 1, H), jnp.bfloat16),
        compiler_params=_compiler_params(),
    )(
        feat.reshape(N, 1, F).astype(jnp.bfloat16),
        hidden,
        mask.astype(jnp.float32).reshape(N, L, 1),
        pp["wq"], pp["wk"], pp["wv"], pp["bvecs"], pp["GH"], pp["GT"],
    )
    return pooled.reshape(N, H)


# ----------------------------------------------------------------------------
# Parameter initialization (deterministic, synthetic)
# ----------------------------------------------------------------------------
def init_params(key, *, V, NTYPE, L, H, F, FF, NH, num_choice):
    ks = jax.random.split(key, 16)
    bf16 = jnp.bfloat16

    def lin(k, fan_in, fan_out):
        w = jax.random.normal(k, (fan_in, fan_out), jnp.float32) * (fan_in ** -0.5)
        b = jnp.zeros((fan_out,), jnp.float32)
        return w, b

    map_w, map_b = lin(ks[0], F, H)
    wq, bq = lin(ks[1], H, H)
    wk, bk = lin(ks[2], H, H)
    wv, bv = lin(ks[3], H, H)
    wo, bo = lin(ks[4], H, H)
    w1, b1 = lin(ks[5], H, FF)
    w2, b2 = lin(ks[6], FF, H)
    pwq, pbq = lin(ks[7], F, H)
    pwk, pbk = lin(ks[8], H, H)
    pwv, pbv = lin(ks[9], H, H)
    fc_w, fc_b = lin(ks[10], 2 * H + F, 1)
    fc1_w, fc1_b = lin(ks[11], F, 1)
    word_emb = jax.random.normal(ks[12], (V, H), jnp.float32) * 0.02
    type_emb = jax.random.normal(ks[13], (NTYPE, H), jnp.float32) * 0.02
    pos_emb = jax.random.normal(ks[14], (L, H), jnp.float32) * 0.02

    d_k = H // NH
    G = jax.nn.one_hot(jnp.arange(H) // d_k, NH, dtype=jnp.float32)   # (H, NH)

    ones_h = jnp.ones((H,), jnp.float32)
    zeros_h = jnp.zeros((H,), jnp.float32)

    return {
        "num_choice": num_choice,
        "n_head": NH,
        "map_w": map_w.astype(bf16), "map_b": map_b,
        "word_emb": word_emb.astype(bf16),
        "type_emb": type_emb.astype(bf16),
        "pos_emb": pos_emb.astype(bf16),
        "layer": {
            "wqkv": jnp.concatenate([wq, wk, wv], axis=1).astype(bf16),   # (H, 3H)
            "bqkv": jnp.concatenate([bq, bk, bv]).reshape(1, 3 * H),      # f32
            "wo": wo.astype(bf16),
            "w1": w1.astype(bf16), "b1": b1.reshape(1, FF),
            "w2": w2.astype(bf16),
            # packed f32 vectors: [bo, ln1_g, ln1_b, b2, ln2_g, ln2_b]
            "vecs": jnp.stack([bo, ones_h, zeros_h, b2, ones_h, zeros_h]),
        },
        "pooler": {
            "wq": pwq.astype(bf16), "wk": pwk.astype(bf16), "wv": pwv.astype(bf16),
            "bvecs": jnp.stack([pbq, pbk, pbv]),        # (3, H) f32
            "GH": G.astype(bf16),                       # (H, NH) one-hot
            "GT": G.T.astype(bf16),                     # (NH, H) one-hot
        },
        "fc_w": fc_w, "fc_b": fc_b,       # final fc / fc1 run in XLA (width-1 outputs)
        "fc1_w": fc1_w, "fc1_b": fc1_b,
    }


# ----------------------------------------------------------------------------
# Forward pass (mirrors KGBert_down_qa.forward)
# ----------------------------------------------------------------------------
def kgbert_down_qa_forward(params, inputs, label, mask_index, f_index,
                           istrain=True, train_part="all"):
    feat = inputs["features"]                                  # (N, F) f32

    if train_part == "roberta":
        # dropout_fc is identity in eval mode; width-1 output -> plain XLA.
        logits = feat @ params["fc1_w"] + params["fc1_b"]
    else:
        # features = activation(mapping(features))
        mapped = linear_gelu(feat, params["map_w"], params["map_b"])   # (N, H) bf16
        N, L = inputs["input_ids"].shape

        emb = (params["word_emb"][inputs["input_ids"]]
               + params["type_emb"][inputs["token_type_ids"]]
               + params["pos_emb"][None, :, :])                # (N, L, H) bf16
        # TODO(synk): exact feature-injection point of the external KGBert encoder is
        # unknown; we splice the mapped feature in at f_index (whose hidden state is
        # later read back as feat_output).
        emb = emb.at[jnp.arange(N), f_index, :].set(mapped)

        # TODO(synk): the real trans_encoder.encoder is a pretrained multi-layer BERT;
        # stand-in here is a single deterministic transformer layer with the same
        # per-layer math (attention + FFN + layernorms), run as a Pallas kernel.
        last_hidden = pallas_encoder_layer(emb, inputs["attention_mask"],
                                           params["layer"])    # (N, L, H) bf16

        # feat_output = last_hidden_state[arange(N), f_index, :]
        feat_output = last_hidden[jnp.arange(N), f_index, :]   # (N, H) bf16

        # the_mask = (1 - ((input_ids_ent != 7).float() + (token_type_ids == 4).float())).bool()
        a = (inputs["input_ids_ent"] != 7).astype(jnp.float32)
        b = (inputs["token_type_ids"] == 4).astype(jnp.float32)
        the_mask = (1.0 - (a + b)) != 0.0                      # True = masked out

        # pool_attn from the PyTorch module is never consumed -> not materialized.
        cls_output = pallas_att_pool(
            feat, last_hidden, the_mask, params["pooler"], n_head=params["n_head"])

        # dropout_fc is identity in eval mode; width-1 fc runs in XLA (f32).
        concat = jnp.concatenate(
            [cls_output.astype(jnp.float32),
             feat_output.astype(jnp.float32),
             feat], axis=1)
        logits = concat @ params["fc_w"] + params["fc_b"]      # (N, 1)

    if istrain:
        lg = logits.reshape(-1, params["num_choice"])
        logp = jax.nn.log_softmax(lg, axis=-1)
        loss = -jnp.mean(jnp.take_along_axis(logp, label[:, None], axis=1))
        return loss
    return logits


# ----------------------------------------------------------------------------
if __name__ == "__main__":
    BATCH, NUM_CHOICE = 2, 2
    N = BATCH * NUM_CHOICE
    # Lane-aligned toy dims: H and F are multiples of 128 so vregs are full and
    # the in-kernel qkv slices fall on 128-lane tile boundaries.
    L, H, F, FF, NH, V, NTYPE = 8, 128, 128, 256, 4, 64, 8

    params = init_params(jax.random.PRNGKey(0), V=V, NTYPE=NTYPE, L=L, H=H,
                         F=F, FF=FF, NH=NH, num_choice=NUM_CHOICE)

    ks = jax.random.split(jax.random.PRNGKey(0), 8)
    inputs = {
        "features": jax.random.normal(ks[0], (N, F), jnp.float32),
        "input_ids": jax.random.randint(ks[1], (N, L), 0, V),
        "token_type_ids": jax.random.randint(ks[2], (N, L), 0, NTYPE),
        "input_ids_ent": jax.random.randint(ks[3], (N, L), 0, 16),
        "input_ids_ft": jax.random.randint(ks[4], (N, L), 0, 2),
        "attention_mask": jnp.ones((N, L), jnp.float32),
    }
    f_index = jax.random.randint(ks[5], (N,), 0, L)
    mask_index = jax.random.randint(ks[6], (N,), 0, L)
    label = jnp.array([0, 1], dtype=jnp.int32)

    logits = kgbert_down_qa_forward(params, inputs, label, mask_index, f_index,
                                    istrain=False)
    loss = kgbert_down_qa_forward(params, inputs, label, mask_index, f_index,
                                  istrain=True)
    logits_roberta = kgbert_down_qa_forward(params, inputs, label, mask_index,
                                            f_index, istrain=False,
                                            train_part="roberta")
    jax.block_until_ready((logits, loss, logits_roberta))
    assert logits.shape == (N, 1)
    assert logits_roberta.shape == (N, 1)
    assert loss.shape == ()
    print("KERNEL_OK")
</pallas_src>

<mosaic_0001>
module attributes {stable_mosaic.version = 11 : i64} {
  func.func @k(%arg0: i32, %arg1: memref<8x128xf32, #tpu.memory_space<vmem>>, %arg2: memref<8x128xf32, #tpu.memory_space<vmem>>, %arg3: memref<8x128xf32, #tpu.memory_space<vmem>>) attributes {dimension_semantics = [#tpu.dimension_semantics<arbitrary>], iteration_bounds = array<i64: 2>, scalar_prefetch = 0 : i64, scratch_operands = 0 : i64, tpu.core_type = #tpu.core_type<tc>, window_params = [{transform_indices = @transform_0, window_bounds = array<i64: 8, 128>}, {pipeline_mode = #tpu.pipeline_mode<synchronous>, transform_indices = @transform_1, window_bounds = array<i64: 8, 128>}, {transform_indices = @transform_2, window_bounds = array<i64: 8, 128>}]} {
    %c0 = arith.constant 0 : index
    %c0_0 = arith.constant 0 : index
    %0 = vector.load %arg1[%c0, %c0_0] : memref<8x128xf32, #tpu.memory_space<vmem>>, vector<8x128xf32>
    %c0_1 = arith.constant 0 : index
    %c0_2 = arith.constant 0 : index
    %1 = vector.load %arg2[%c0_1, %c0_2] : memref<8x128xf32, #tpu.memory_space<vmem>>, vector<8x128xf32>
    %2 = arith.addf %0, %1 : vector<8x128xf32>
    %c0_3 = arith.constant 0 : index
    %c0_4 = arith.constant 0 : index
    %3 = vector.load %arg3[%c0_3, %c0_4] : memref<8x128xf32, #tpu.memory_space<vmem>>, vector<8x128xf32>
    tpu.vector_store %arg3[%c0_3, %c0_4], %2 {strides = array<i32>} : memref<8x128xf32, #tpu.memory_space<vmem>>, vector<8x128xf32>,
    return
  }
  func.func @transform_0(%arg0: i32) -> (i32, i32) {
    %c0_i32 = arith.constant 0 : i32
    %c0_i32_0 = arith.constant 0 : i32
    return %arg0, %c0_i32 : i32, i32
  }
  func.func @transform_1(%arg0: i32) -> (i32, i32) {
    %c0_i32 = arith.constant 0 : i32
    %c0_i32_0 = arith.constant 0 : i32
    %c0_i32_1 = arith.constant 0 : i32
    return %c0_i32, %c0_i32_0 : i32, i32
  }
  func.func @transform_2(%arg0: i32) -> (i32, i32) {
    %c0_i32 = arith.constant 0 : i32
    %c0_i32_0 = arith.constant 0 : i32
    return %arg0, %c0_i32 : i32, i32
  }
}

module attributes {stable_mosaic.version = 11 : i64} {
  func.func @_encoder_layer_kernel(%arg0: i32, %arg1: memref<4x8x128xbf16, #tpu.memory_space<vmem>>, %arg2: memref<4x1x8xf32, #tpu.memory_space<vmem>>, %arg3: memref<128x384xbf16, #tpu.memory_space<vmem>>, %arg4: memref<1x384xf32, #tpu.memory_space<vmem>>, %arg5: memref<128x128xbf16, #tpu.memory_space<vmem>>, %arg6: memref<128x256xbf16, #tpu.memory_space<vmem>>, %arg7: memref<1x256xf32, #tpu.memory_space<vmem>>, %arg8: memref<256x128xbf16, #tpu.memory_space<vmem>>, %arg9: memref<6x128xf32, #tpu.memory_space<vmem>>, %arg10: memref<4x8x128xbf16, #tpu.memory_space<vmem>>) attributes {dimension_semantics = [#tpu.dimension_semantics<parallel>], iteration_bounds = array<i64: 1>, scalar_prefetch = 0 : i64, scratch_operands = 0 : i64, tpu.core_type = #tpu.core_type<tc>, window_params = [{transform_indices = @transform_0, window_bounds = array<i64: 4, 8, 128>}, {transform_indices = @transform_1, window_bounds = array<i64: 4, 1, 8>}, {pipeline_mode = #tpu.pipeline_mode<synchronous>, transform_indices = @transform_2, window_bounds = array<i64: 128, 384>}, {pipeline_mode = #tpu.pipeline_mode<synchronous>, transform_indices = @transform_3, window_bounds = array<i64: 1, 384>}, {pipeline_mode = #tpu.pipeline_mode<synchronous>, transform_indices = @transform_4, window_bounds = array<i64: 128, 128>}, {pipeline_mode = #tpu.pipeline_mode<synchronous>, transform_indices = @transform_5, window_bounds = array<i64: 128, 256>}, {pipeline_mode = #tpu.pipeline_mode<synchronous>, transform_indices = @transform_6, window_bounds = array<i64: 1, 256>}, {pipeline_mode = #tpu.pipeline_mode<synchronous>, transform_indices = @transform_7, window_bounds = array<i64: 256, 128>}, {pipeline_mode = #tpu.pipeline_mode<synchronous>, transform_indices = @transform_8, window_bounds = array<i64: 6, 128>}, {transform_indices = @transform_9, window_bounds = array<i64: 4, 8, 128>}]} {
    %c0 = arith.constant 0 : index
    %c0_0 = arith.constant 0 : index
    %c0_1 = arith.constant 0 : index
    %0 = vector.load %arg1[%c0, %c0_0, %c0_1] : memref<4x8x128xbf16, #tpu.memory_space<vmem>>, vector<4x8x128xbf16>
    %1 = vector.shape_cast %0 : vector<4x8x128xbf16> to vector<32x128xbf16>
    %c0_2 = arith.constant 0 : index
    %c0_3 = arith.constant 0 : index
    %c0_4 = arith.constant 0 : index
    %2 = vector.load %arg2[%c0_2, %c0_3, %c0_4] : memref<4x1x8xf32, #tpu.memory_space<vmem>>, vector<4x1x8xf32>
    %c0_5 = arith.constant 0 : index
    %c0_6 = arith.constant 0 : index
    %3 = vector.load %arg9[%c0_5, %c0_6] : memref<6x128xf32, #tpu.memory_space<vmem>>, vector<6x128xf32>
    %4 = vector.extract_strided_slice %3 {offsets = [0, 0], sizes = [1, 128], strides = [1, 1]} : vector<6x128xf32> to vector<1x128xf32>
    %5 = vector.shape_cast %4 : vector<1x128xf32> to vector<128xf32>
    %6 = vector.extract_strided_slice %3 {offsets = [1, 0], sizes = [1, 128], strides = [1, 1]} : vector<6x128xf32> to vector<1x128xf32>
    %7 = vector.shape_cast %6 : vector<1x128xf32> to vector<128xf32>
    %8 = vector.extract_strided_slice %3 {offsets = [2, 0], sizes = [1, 128], strides = [1, 1]} : vector<6x128xf32> to vector<1x128xf32>
    %9 = vector.shape_cast %8 : vector<1x128xf32> to vector<128xf32>
    %10 = vector.extract_strided_slice %3 {offsets = [3, 0], sizes = [1, 128], strides = [1, 1]} : vector<6x128xf32> to vector<1x128xf32>
    %11 = vector.shape_cast %10 : vector<1x128xf32> to vector<128xf32>
    %12 = vector.extract_strided_slice %3 {offsets = [4, 0], sizes = [1, 128], strides = [1, 1]} : vector<6x128xf32> to vector<1x128xf32>
    %13 = vector.shape_cast %12 : vector<1x128xf32> to vector<128xf32>
    %14 = vector.extract_strided_slice %3 {offsets = [5, 0], sizes = [1, 128], strides = [1, 1]} : vector<6x128xf32> to vector<1x128xf32>
    %15 = vector.shape_cast %14 : vector<1x128xf32> to vector<128xf32>
    %c0_7 = arith.constant 0 : index
    %c0_8 = arith.constant 0 : index
    %16 = vector.load %arg3[%c0_7, %c0_8] : memref<128x384xbf16, #tpu.memory_space<vmem>>, vector<128x384xbf16>
    %cst = arith.constant dense<0.000000e+00> : vector<32x384xf32>
    %17 = tpu.matmul %1, %16, %cst {dimension_numbers = #tpu.dot_dimension_numbers<[1], [0], [0], [1], [0, 0, 1, 1], [], []>} : vector<32x128xbf16>, vector<128x384xbf16>, vector<32x384xf32> -> vector<32x384xf32>
    %c0_9 = arith.constant 0 : index
    %c0_10 = arith.constant 0 : index
    %18 = vector.load %arg4[%c0_9, %c0_10] : memref<1x384xf32, #tpu.memory_space<vmem>>, vector<1x384xf32>
    %19 = vector.broadcast %18 : vector<1x384xf32> to vector<32x384xf32>
    %20 = arith.addf %17, %19 : vector<32x384xf32>
    %21 = arith.truncf %20 : vector<32x384xf32> to vector<32x384xbf16>
    %22 = vector.extract_strided_slice %21 {offsets = [0, 0], sizes = [32, 128], strides = [1, 1]} : vector<32x384xbf16> to vector<32x128xbf16>
    %23 = vector.shape_cast %22 : vector<32x128xbf16> to vector<4x8x128xbf16>
    %24 = vector.extract_strided_slice %21 {offsets = [0, 128], sizes = [32, 128], strides = [1, 1]} : vector<32x384xbf16> to vector<32x128xbf16>
    %25 = vector.shape_cast %24 : vector<32x128xbf16> to vector<4x8x128xbf16>
    %26 = vector.extract_strided_slice %21 {offsets = [0, 256], sizes = [32, 128], strides = [1, 1]} : vector<32x384xbf16> to vector<32x128xbf16>
    %27 = vector.shape_cast %26 : vector<32x128xbf16> to vector<4x8x128xbf16>
    "tpu.trace_start"() <{level = 10 : i32, message = "bqd,bkd->bqk"}> : () -> ()
    %cst_11 = arith.constant dense<0.000000e+00> : vector<4x8x8xf32>
    %28 = tpu.matmul %23, %25, %cst_11 {dimension_numbers = #tpu.dot_dimension_numbers<[2], [2], [1], [1], [0, 0, 0, 1, 1, 1], [0], [0]>} : vector<4x8x128xbf16>, vector<4x8x128xbf16>, vector<4x8x8xf32> -> vector<4x8x8xf32>
    "tpu.trace_stop"() : () -> ()
    %cst_12 = arith.constant 0.0883883461 : f32
    %29 = vector.broadcast %cst_12 : f32 to vector<4x8x8xf32>
    %30 = arith.mulf %28, %29 : vector<4x8x8xf32>
    %cst_13 = arith.constant 1.000000e+00 : f32
    %31 = vector.broadcast %cst_13 : f32 to vector<4x1x8xf32>
    %32 = arith.subf %2, %31 : vector<4x1x8xf32>
    %cst_14 = arith.constant 1.000000e+09 : f32
    %33 = vector.broadcast %cst_14 : f32 to vector<4x1x8xf32>
    %34 = arith.mulf %32, %33 : vector<4x1x8xf32>
    %35 = vector.broadcast %34 : vector<4x1x8xf32> to vector<4x8x8xf32>
    %36 = arith.addf %30, %35 : vector<4x8x8xf32>
    %cst_15 = arith.constant dense<0xFF800000> : vector<4x8xf32>
    %37 = vector.multi_reduction <maximumf>, %36, %cst_15 [2] : vector<4x8x8xf32> to vector<4x8xf32>
    %38 = vector.shape_cast %37 : vector<4x8xf32> to vector<4x8x1xf32>
    %39 = vector.broadcast %38 : vector<4x8x1xf32> to vector<4x8x8xf32>
    %40 = arith.subf %36, %39 : vector<4x8x8xf32>
    %41 = math.exp %40 : vector<4x8x8xf32>
    %cst_16 = arith.constant dense<0.000000e+00> : vector<4x8xf32>
    %42 = vector.multi_reduction <add>, %41, %cst_16 [2] : vector<4x8x8xf32> to vector<4x8xf32>
    %43 = vector.shape_cast %42 : vector<4x8xf32> to vector<4x8x1xf32>
    %44 = tpu.reciprocal %43 {approx = true} : vector<4x8x1xf32> -> vector<4x8x1xf32>
    %45 = vector.broadcast %44 : vector<4x8x1xf32> to vector<4x8x8xf32>
    %46 = arith.mulf %41, %45 : vector<4x8x8xf32>
    %47 = arith.truncf %46 : vector<4x8x8xf32> to vector<4x8x8xbf16>
    "tpu.trace_start"() <{level = 10 : i32, message = "bqk,bkd->bqd"}> : () -> ()
    %cst_17 = arith.constant dense<0.000000e+00> : vector<4x8x128xf32>
    %48 = tpu.matmul %47, %27, %cst_17 {dimension_numbers = #tpu.dot_dimension_numbers<[2], [1], [1], [2], [0, 0, 0, 1, 1, 2], [0], [0]>} : vector<4x8x8xbf16>, vector<4x8x128xbf16>, vector<4x8x128xf32> -> vector<4x8x128xf32>
    "tpu.trace_stop"() : () -> ()
    %49 = vector.shape_cast %48 : vector<4x8x128xf32> to vector<32x128xf32>
    %50 = arith.truncf %49 : vector<32x128xf32> to vector<32x128xbf16>
    %51 = arith.extf %1 : vector<32x128xbf16> to vector<32x128xf32>
    %c0_18 = arith.constant 0 : index
    %c0_19 = arith.constant 0 : index
    %52 = vector.load %arg5[%c0_18, %c0_19] : memref<128x128xbf16, #tpu.memory_space<vmem>>, vector<128x128xbf16>
    %cst_20 = arith.constant dense<0.000000e+00> : vector<32x128xf32>
    %53 = tpu.matmul %50, %52, %cst_20 {dimension_numbers = #tpu.dot_dimension_numbers<[1], [0], [0], [1], [0, 0, 1, 1], [], []>} : vector<32x128xbf16>, vector<128x128xbf16>, vector<32x128xf32> -> vector<32x128xf32>
    %54 = arith.addf %51, %53 : vector<32x128xf32>
    %55 = vector.shape_cast %5 : vector<128xf32> to vector<1x128xf32>
    %56 = vector.broadcast %55 : vector<1x128xf32> to vector<32x128xf32>
    %57 = arith.addf %54, %56 : vector<32x128xf32>
    %cst_21 = arith.constant dense<0.000000e+00> : vector<32xf32>
    %58 = vector.multi_reduction <add>, %57, %cst_21 [1] : vector<32x128xf32> to vector<32xf32>
    %59 = vector.shape_cast %58 : vector<32xf32> to vector<32x1xf32>
    %cst_22 = arith.constant 1.280000e+02 : f32
    %60 = vector.broadcast %cst_22 : f32 to vector<32x1xf32>
    %61 = arith.divf %59, %60 : vector<32x1xf32>
    %62 = vector.broadcast %61 : vector<32x1xf32> to vector<32x128xf32>
    %63 = arith.subf %57, %62 : vector<32x128xf32>
    %64 = arith.mulf %63, %63 : vector<32x128xf32>
    %cst_23 = arith.constant dense<0.000000e+00> : vector<32xf32>
    %65 = vector.multi_reduction <add>, %64, %cst_23 [1] : vector<32x128xf32> to vector<32xf32>
    %66 = vector.shape_cast %65 : vector<32xf32> to vector<32x1xf32>
    %cst_24 = arith.constant 1.280000e+02 : f32
    %67 = vector.broadcast %cst_24 : f32 to vector<32x1xf32>
    %68 = arith.divf %66, %67 : vector<32x1xf32>
    %69 = vector.broadcast %61 : vector<32x1xf32> to vector<32x128xf32>
    %70 = arith.subf %57, %69 : vector<32x128xf32>
    %cst_25 = arith.constant 9.99999996E-13 : f32
    %71 = vector.broadcast %cst_25 : f32 to vector<32x1xf32>
    %72 = arith.addf %68, %71 : vector<32x1xf32>
    %73 = math.rsqrt %72 : vector<32x1xf32>
    %74 = vector.broadcast %73 : vector<32x1xf32> to vector<32x128xf32>
    %75 = arith.mulf %70, %74 : vector<32x128xf32>
    %76 = vector.shape_cast %7 : vector<128xf32> to vector<1x128xf32>
    %77 = vector.broadcast %76 : vector<1x128xf32> to vector<32x128xf32>
    %78 = arith.mulf %75, %77 : vector<32x128xf32>
    %79 = vector.shape_cast %9 : vector<128xf32> to vector<1x128xf32>
    %80 = vector.broadcast %79 : vector<1x128xf32> to vector<32x128xf32>
    %81 = arith.addf %78, %80 : vector<32x128xf32>
    %82 = arith.truncf %81 : vector<32x128xf32> to vector<32x128xbf16>
    %c0_26 = arith.constant 0 : index
    %c0_27 = arith.constant 0 : index
    %83 = vector.load %arg6[%c0_26, %c0_27] : memref<128x256xbf16, #tpu.memory_space<vmem>>, vector<128x256xbf16>
    %cst_28 = arith.constant dense<0.000000e+00> : vector<32x256xf32>
    %84 = tpu.matmul %82, %83, %cst_28 {dimension_numbers = #tpu.dot_dimension_numbers<[1], [0], [0], [1], [0, 0, 1, 1], [], []>} : vector<32x128xbf16>, vector<128x256xbf16>, vector<32x256xf32> -> vector<32x256xf32>
    %c0_29 = arith.constant 0 : index
    %c0_30 = arith.constant 0 : index
    %85 = vector.load %arg7[%c0_29, %c0_30] : memref<1x256xf32, #tpu.memory_space<vmem>>, vector<1x256xf32>
    %86 = vector.broadcast %85 : vector<1x256xf32> to vector<32x256xf32>
    %87 = arith.addf %84, %86 : vector<32x256xf32>
    %88 = arith.mulf %87, %87 : vector<32x256xf32>
    %89 = arith.mulf %87, %88 : vector<32x256xf32>
    %cst_31 = arith.constant 4.471500e-02 : f32
    %90 = vector.broadcast %cst_31 : f32 to vector<32x256xf32>
    %91 = arith.mulf %90, %89 : vector<32x256xf32>
    %92 = arith.addf %87, %91 : vector<32x256xf32>
    %cst_32 = arith.constant 0.797884583 : f32
    %93 = vector.broadcast %cst_32 : f32 to vector<32x256xf32>
    %94 = arith.mulf %93, %92 : vector<32x256xf32>
    %95 = math.tanh %94 : vector<32x256xf32>
    %cst_33 = arith.constant 1.000000e+00 : f32
    %96 = vector.broadcast %cst_33 : f32 to vector<32x256xf32>
    %97 = arith.addf %96, %95 : vector<32x256xf32>
    %cst_34 = arith.constant 5.000000e-01 : f32
    %98 = vector.broadcast %cst_34 : f32 to vector<32x256xf32>
    %99 = arith.mulf %98, %97 : vector<32x256xf32>
    %100 = arith.mulf %87, %99 : vector<32x256xf32>
    %101 = arith.truncf %100 : vector<32x256xf32> to vector<32x256xbf16>
    %c0_35 = arith.constant 0 : index
    %c0_36 = arith.constant 0 : index
    %102 = vector.load %arg8[%c0_35, %c0_36] : memref<256x128xbf16, #tpu.memory_space<vmem>>, vector<256x128xbf16>
    %cst_37 = arith.constant dense<0.000000e+00> : vector<32x128xf32>
    %103 = tpu.matmul %101, %102, %cst_37 {dimension_numbers = #tpu.dot_dimension_numbers<[1], [0], [0], [1], [0, 0, 1, 1], [], []>} : vector<32x256xbf16>, vector<256x128xbf16>, vector<32x128xf32> -> vector<32x128xf32>
    %104 = vector.shape_cast %11 : vector<128xf32> to vector<1x128xf32>
    %105 = vector.broadcast %104 : vector<1x128xf32> to vector<32x128xf32>
    %106 = arith.addf %103, %105 : vector<32x128xf32>
    %107 = arith.addf %81, %106 : vector<32x128xf32>
    %cst_38 = arith.constant dense<0.000000e+00> : vector<32xf32>
    %108 = vector.multi_reduction <add>, %107, %cst_38 [1] : vector<32x128xf32> to vector<32xf32>
    %109 = vector.shape_cast %108 : vector<32xf32> to vector<32x1xf32>
    %cst_39 = arith.constant 1.280000e+02 : f32
    %110 = vector.broadcast %cst_39 : f32 to vector<32x1xf32>
    %111 = arith.divf %109, %110 : vector<32x1xf32>
    %112 = vector.broadcast %111 : vector<32x1xf32> to vector<32x128xf32>
    %113 = arith.subf %107, %112 : vector<32x128xf32>
    %114 = arith.mulf %113, %113 : vector<32x128xf32>
    %cst_40 = arith.constant dense<0.000000e+00> : vector<32xf32>
    %115 = vector.multi_reduction <add>, %114, %cst_40 [1] : vector<32x128xf32> to vector<32xf32>
    %116 = vector.shape_cast %115 : vector<32xf32> to vector<32x1xf32>
    %cst_41 = arith.constant 1.280000e+02 : f32
    %117 = vector.broadcast %cst_41 : f32 to vector<32x1xf32>
    %118 = arith.divf %116, %117 : vector<32x1xf32>
    %119 = vector.broadcast %111 : vector<32x1xf32> to vector<32x128xf32>
    %120 = arith.subf %107, %119 : vector<32x128xf32>
    %cst_42 = arith.constant 9.99999996E-13 : f32
    %121 = vector.broadcast %cst_42 : f32 to vector<32x1xf32>
    %122 = arith.addf %118, %121 : vector<32x1xf32>
    %123 = math.rsqrt %122 : vector<32x1xf32>
    %124 = vector.broadcast %123 : vector<32x1xf32> to vector<32x128xf32>
    %125 = arith.mulf %120, %124 : vector<32x128xf32>
    %126 = vector.shape_cast %13 : vector<128xf32> to vector<1x128xf32>
    %127 = vector.broadcast %126 : vector<1x128xf32> to vector<32x128xf32>
    %128 = arith.mulf %125, %127 : vector<32x128xf32>
    %129 = vector.shape_cast %15 : vector<128xf32> to vector<1x128xf32>
    %130 = vector.broadcast %129 : vector<1x128xf32> to vector<32x128xf32>
    %131 = arith.addf %128, %130 : vector<32x128xf32>
    %132 = vector.shape_cast %131 : vector<32x128xf32> to vector<4x8x128xf32>
    %133 = arith.truncf %132 : vector<4x8x128xf32> to vector<4x8x128xbf16>
    %c0_43 = arith.constant 0 : index
    %c0_44 = arith.constant 0 : index
    %c0_45 = arith.constant 0 : index
    %134 = vector.load %arg10[%c0_43, %c0_44, %c0_45] : memref<4x8x128xbf16, #tpu.memory_space<vmem>>, vector<4x8x128xbf16>
    tpu.vector_store %arg10[%c0_43, %c0_44, %c0_45], %133 {strides = array<i32>} : memref<4x8x128xbf16, #tpu.memory_space<vmem>>, vector<4x8x128xbf16>,
    return
  }
  func.func @transform_0(%arg0: i32) -> (i32, i32, i32) {
    %c0_i32 = arith.constant 0 : i32
    %c0_i32_0 = arith.constant 0 : i32
    %c0_i32_1 = arith.constant 0 : i32
    return %arg0, %c0_i32, %c0_i32_0 : i32, i32, i32
  }
  func.func @transform_1(%arg0: i32) -> (i32, i32, i32) {
    %c0_i32 = arith.constant 0 : i32
    %c0_i32_0 = arith.constant 0 : i32
    %c0_i32_1 = arith.constant 0 : i32
    return %arg0, %c0_i32, %c0_i32_0 : i32, i32, i32
  }
  func.func @transform_2(%arg0: i32) -> (i32, i32) {
    %c0_i32 = arith.constant 0 : i32
    %c0_i32_0 = arith.constant 0 : i32
    %c0_i32_1 = arith.constant 0 : i32
    return %c0_i32, %c0_i32_0 : i32, i32
  }
  func.func @transform_3(%arg0: i32) -> (i32, i32) {
    %c0_i32 = arith.constant 0 : i32
    %c0_i32_0 = arith.constant 0 : i32
    %c0_i32_1 = arith.constant 0 : i32
    return %c0_i32, %c0_i32_0 : i32, i32
  }
  func.func @transform_4(%arg0: i32) -> (i32, i32) {
    %c0_i32 = arith.constant 0 : i32
    %c0_i32_0 = arith.constant 0 : i32
    %c0_i32_1 = arith.constant 0 : i32
    return %c0_i32, %c0_i32_0 : i32, i32
  }
  func.func @transform_5(%arg0: i32) -> (i32, i32) {
    %c0_i32 = arith.constant 0 : i32
    %c0_i32_0 = arith.constant 0 : i32
    %c0_i32_1 = arith.constant 0 : i32
    return %c0_i32, %c0_i32_0 : i32, i32
  }
  func.func @transform_6(%arg0: i32) -> (i32, i32) {
    %c0_i32 = arith.constant 0 : i32
    %c0_i32_0 = arith.constant 0 : i32
    %c0_i32_1 = arith.constant 0 : i32
    return %c0_i32, %c0_i32_0 : i32, i32
  }
  func.func @transform_7(%arg0: i32) -> (i32, i32) {
    %c0_i32 = arith.constant 0 : i32
    %c0_i32_0 = arith.constant 0 : i32
    %c0_i32_1 = arith.constant 0 : i32
    return %c0_i32, %c0_i32_0 : i32, i32
  }
  func.func @transform_8(%arg0: i32) -> (i32, i32) {
    %c0_i32 = arith.constant 0 : i32
    %c0_i32_0 = arith.constant 0 : i32
    %c0_i32_1 = arith.constant 0 : i32
    return %c0_i32, %c0_i32_0 : i32, i32
  }
  func.func @transform_9(%arg0: i32) -> (i32, i32, i32) {
    %c0_i32 = arith.constant 0 : i32
    %c0_i32_0 = arith.constant 0 : i32
    %c0_i32_1 = arith.constant 0 : i32
    return %arg0, %c0_i32, %c0_i32_0 : i32, i32, i32
  }
}

</mosaic_0001>

<llo_original>
// kernel: tpu_custom_call.1
$region0: #{tpu_custom_call.1}
  #allocation0 [shape = 'u32[]', space=smem, size = 0x4, offset = 0x4, fixed_abs, tag = 'smem constant byte address 0x4 - core index']
  #allocation1 [shape = 'u32[144,128]{1,0:T(1,128)}', space=vmem, size = 0x12000, scoped, tag = 'internal scratch']
  %s0 = inlined_call_operand.hbm [shape: f32[16,128], index: 0, kind: input, shape index: {}]
  %s1 = inlined_call_operand.hbm [shape: f32[8,128], index: 1, kind: input, shape index: {}]
  %s2 = inlined_call_operand.hbm [shape: f32[16,128], index: 2, kind: output, shape index: {}]
  %s3 = sld [smem:[#allocation0]]
  $region49: #{tpu_custom_call.1} parent=0
    _
  %s5 = ssub.s32 1, %s3
  %s6 = scalar_select 0, %s5, %s3
  $region1: #{tpu_custom_call.1} parent=0
    #allocation2 [shape = 'u8[8192]{0}', space=vmem, size = 0x2000, scoped, tag = 'input window, operand 0']
    #allocation3 [shape = 's32[2]{0}', space=sflag, size = 0x8, scoped, tag = 'scoped memory for tpu_custom_call.1']
    #allocation4 [shape = 's32[2]{0}', space=sflag, size = 0x8, scoped, tag = 'scoped memory for tpu_custom_call.1']
    #allocation5 [shape = 'u8[4096]{0}', space=vmem, size = 0x1000, scoped, tag = 'input window, operand 1, single buffered']
    #allocation6 [shape = 's32[1]{0}', space=sflag, size = 0x4, scoped, tag = 'scoped memory for tpu_custom_call.1']
    #allocation7 [shape = 'u8[8192]{0}', space=vmem, size = 0x2000, scoped, tag = 'output window, operand 0']
    %7 = vsyncpa [#allocation3], 0
    %s8 = scalar_lea.sflag [#allocation3], 1
    %9 = vsyncpa %s8, 0
    %10 = vsyncpa [#allocation6], 0
    %11 = vsyncpa [#allocation4], 0
    %s12 = scalar_lea.sflag [#allocation4], 1
    %13 = vsyncpa %s12, 0
    loop: start=0, step=1, limit=4
    $region2: #{tpu_custom_call.1} parent=1 // loop_pre_header
      _
    $region3: #{tpu_custom_call.1} parent=1 // loop_header
      %s15 = sphi 0, %s19
      %p16 = scmp.ge.s32.totalorder %s15, 4
      %s25 = sphi 0, %s27
      %s28 = sphi 0, %s25
      %s29 = sphi 0, %s28
      %s45 = sphi 0, %s29
      %s49 = sphi 0, %s49
      %s51 = sphi 0, %s49
      %s52 = sphi 0, %s51
      %s66 = sphi 0, %s52
      %s72 = sphi 0, %s74
      %s75 = sphi 0, %s72
      %s76 = sphi 0, %s75
      %s92 = sphi 0, %s76
    $region4: #{tpu_custom_call.1} parent=1 // loop_header_branch
      %18 = sbr.rel (%p16) target = $region8
    $region5: #{tpu_custom_call.1} parent=1 // loop_body
      %s20 = ssub.s32 %s15, 1
      %s21 = ssub.s32 %s15, 2
      %s22 = sadd.s32 %s15, 1
      %s23 = ssub.s32 %s15, %s22
      %p24 = scmp.eq.s32.totalorder %s23, 0
      %s26 = sadd.s32 %s25, 1
      %s27 = scalar_select %p24, %s25, %s26
      %p30 = pneg %p24
      %p31 = scmp.eq.s32.totalorder %s15, 1
      %p32 = por %p30, %p31
      %p33 = scmp.ne.s32.totalorder %s25, %s28
      %p34 = scmp.eq.s32.totalorder %s15, 0
      %p35 = por %p33, %p34
      %p36 = scmp.ne.s32.totalorder %s25, %s28
      %p37 = scmp.eq.s32.totalorder %s20, 1
      %p38 = por %p36, %p37
      %p39 = scmp.ne.s32.totalorder %s28, %s29
      %p40 = scmp.eq.s32.totalorder %s20, 0
      %p41 = por %p39, %p40
      %p42 = scmp.ne.s32.totalorder %s28, %s29
      %p43 = scmp.eq.s32.totalorder %s21, 1
      %p44 = por %p42, %p43
      %p46 = scmp.ne.s32.totalorder %s29, %s45
      %p47 = scmp.eq.s32.totalorder %s21, 0
      %p48 = por %p46, %p47
      %s50 = sadd.s32 %s49, 1
      %p53 = scmp.eq.s32.totalorder %s15, 1
      %p54 = scmp.ne.s32.totalorder %s49, %s51
      %p55 = scmp.eq.s32.totalorder %s15, 0
      %p56 = por %p54, %p55
      %p57 = scmp.ne.s32.totalorder %s49, %s51
      %p58 = scmp.eq.s32.totalorder %s20, 1
      %p59 = por %p57, %p58
      %p60 = scmp.ne.s32.totalorder %s51, %s52
      %p61 = scmp.eq.s32.totalorder %s20, 0
      %p62 = por %p60, %p61
      %p63 = scmp.ne.s32.totalorder %s51, %s52
      %p64 = scmp.eq.s32.totalorder %s21, 1
      %p65 = por %p63, %p64
      %p67 = scmp.ne.s32.totalorder %s52, %s66
      %p68 = scmp.eq.s32.totalorder %s21, 0
      %p69 = por %p67, %p68
      %s70 = ssub.s32 %s15, %s22
      %p71 = scmp.eq.s32.totalorder %s70, 0
      %s73 = sadd.s32 %s72, 1
      %s74 = scalar_select %p71, %s72, %s73
      %p77 = pneg %p71
      %p78 = scmp.eq.s32.totalorder %s15, 1
      %p79 = por %p77, %p78
      %p80 = scmp.ne.s32.totalorder %s72, %s75
      %p81 = scmp.eq.s32.totalorder %s15, 0
      %p82 = por %p80, %p81
      %p83 = scmp.ne.s32.totalorder %s72, %s75
      %p84 = scmp.eq.s32.totalorder %s20, 1
      %p85 = por %p83, %p84
      %p86 = scmp.ne.s32.totalorder %s75, %s76
      %p87 = scmp.eq.s32.totalorder %s20, 0
      %p88 = por %p86, %p87
      %p89 = scmp.ne.s32.totalorder %s75, %s76
      %p90 = scmp.eq.s32.totalorder %s21, 1
      %p91 = por %p89, %p90
      %p93 = scmp.ne.s32.totalorder %s76, %s92
      %p94 = scmp.eq.s32.totalorder %s21, 0
      %p95 = por %p93, %p94
      %p96 = scmp.le.s32.totalorder 1, %s15
      %p97 = scmp.lt.s32.totalorder %s15, 3
      %p98 = pnand %p96, %p97
      %p99 = pneg %p98
      // Predicated region
      $region9: #{tpu_custom_call.1} parent=5 // pred_check
        _
      $region10: #{tpu_custom_call.1} parent=5 // pred_check_branch
        %101 = sbr.rel (%p98) target = $region12
      $region11: #{tpu_custom_call.1} parent=5 // pred_region
        %s102 = ssub.s32 %s15, 1
        // Predicated region
        $region13: #{tpu_custom_call.1} parent=11 // pred_check
          %p103 = pneg %p62
        $region14: #{tpu_custom_call.1} parent=11 // pred_check_branch
          %105 = sbr.rel (%p103) target = $region16
        $region15: #{tpu_custom_call.1} parent=11 // pred_region
          %s107 = ssub.s32 128, 128
          %108 = vsyncadd [#allocation6], %s107
          %s110 = sshll.u32 [#allocation5], 4
          %s111 = int_to_ptr.vmem [resolvable:$true] %s110
          %113 = dma.hbm_to_vmem [thread:$0]  %s1, 128, %s111, [#allocation6]
        $region16: #{tpu_custom_call.1} parent=11 // pred_fallthru
          _
      $region12: #{tpu_custom_call.1} parent=5 // pred_fallthru
        _
      %p114 = scmp.lt.s32.totalorder %s15, 2
      // Predicated region
      $region17: #{tpu_custom_call.1} parent=5 // pred_check
        %p115 = pneg %p114
      $region18: #{tpu_custom_call.1} parent=5 // pred_check_branch
        %117 = sbr.rel (%p115) target = $region20
      $region19: #{tpu_custom_call.1} parent=5 // pred_region
        // Predicated region
        $region21: #{tpu_custom_call.1} parent=19 // pred_check
          %p118 = pneg %p35
        $region22: #{tpu_custom_call.1} parent=19 // pred_check_branch
          %120 = sbr.rel (%p118) target = $region24
        $region23: #{tpu_custom_call.1} parent=19 // pred_region
          %s121 = sand.u32 %s25, 1
          %s122 = scalar_lea.sflag [#allocation3], %s121
          %s123 = sand.u32 %s25, 1
          %s124 = smul.addr %s123, 8
          %s125 = scalar_lea.vmem [#allocation2], %s124
          %s127 = ssub.s32 128, 128
          %128 = vsyncadd %s122, %s127
          %s129 = smul.addr %s15, 128
          %s130 = scalar_lea.hbm %s0, %s129
          %s132 = sshll.u32 %s125, 4
          %s133 = int_to_ptr.vmem [resolvable:$true] %s132
          %135 = dma.hbm_to_vmem [thread:$0]  %s130, 128, %s133, %s122
        $region24: #{tpu_custom_call.1} parent=19 // pred_fallthru
          _
      $region20: #{tpu_custom_call.1} parent=5 // pred_fallthru
        _
      %p136 = scmp.le.s32.totalorder 1, %s15
      %p137 = scmp.lt.s32.totalorder %s15, 3
      %p138 = pnand %p136, %p137
      %p139 = pneg %p138
      // Predicated region
      $region25: #{tpu_custom_call.1} parent=5 // pred_check
        _
      $region26: #{tpu_custom_call.1} parent=5 // pred_check_branch
        %141 = sbr.rel (%p138) target = $region28
      $region27: #{tpu_custom_call.1} parent=5 // pred_region
        %s142 = ssub.s32 %s15, 1
        %s143 = sand.u32 %s28, 1
        %s144 = scalar_lea.sflag [#allocation3], %s143
        %s145 = sand.u32 %s28, 1
        %s146 = smul.addr %s145, 8
        %s147 = scalar_lea.vmem [#allocation2], %s146
        // Predicated region
        $region29: #{tpu_custom_call.1} parent=27 // pred_check
          %p148 = pneg %p41
        $region30: #{tpu_custom_call.1} parent=27 // pred_check_branch
          %150 = sbr.rel (%p148) target = $region32
        $region31: #{tpu_custom_call.1} parent=27 // pred_region
          %151 = dma.done %s144, 128
        $region32: #{tpu_custom_call.1} parent=27 // pred_fallthru
          _
        // Predicated region
        $region33: #{tpu_custom_call.1} parent=27 // pred_check
          %p152 = pneg %p62
        $region34: #{tpu_custom_call.1} parent=27 // pred_check_branch
          %154 = sbr.rel (%p152) target = $region36
        $region35: #{tpu_custom_call.1} parent=27 // pred_region
          %155 = dma.done [#allocation6], 128
        $region36: #{tpu_custom_call.1} parent=27 // pred_fallthru
          _
        %s156 = sand.u32 %s28, 1
        %s157 = scalar_lea.sflag [#allocation3], %s156
        %s158 = sand.u32 %s28, 1
        %s159 = smul.addr %s158, 8
        %s160 = scalar_lea.vmem [#allocation2], %s159
        %p161 = pneg %p41
        %p162 = pneg %p38
        %p163 = pneg %p62
        %p164 = pneg %p59
        %p165 = pneg %p88
        %p166 = pneg %p85
        %s167 = sand.u32 %s75, 1
        %s168 = scalar_lea.sflag [#allocation4], %s167
        %s169 = sand.u32 %s75, 1
        %s170 = smul.addr %s169, 8
        %s171 = scalar_lea.vmem [#allocation7], %s170
        %v172 = vld [vmem:[%s147] sm:$0xff]
        %v173 = vld [vmem:[#allocation5] sm:$0xff]
        %v174 = vadd.f32 %v172, %v173
        %175 = vst [vmem:[%s171] sm:$0xff] %v174
        %s176 = sand.u32 %s75, 1
        %s177 = scalar_lea.sflag [#allocation4], %s176
        %s178 = sand.u32 %s75, 1
        %s179 = smul.addr %s178, 8
        %s180 = scalar_lea.vmem [#allocation7], %s179
        // Predicated region
        $region37: #{tpu_custom_call.1} parent=27 // pred_check
          %p181 = pneg %p85
        $region38: #{tpu_custom_call.1} parent=27 // pred_check_branch
          %183 = sbr.rel (%p181) target = $region40
        $region39: #{tpu_custom_call.1} parent=27 // pred_region
          %s185 = ssub.s32 128, 128
          %186 = vsyncadd %s177, %s185
          %s187 = smul.addr %s20, 128
          %s188 = scalar_lea.hbm %s2, %s187
          %s190 = sshll.u32 %s180, 4
          %s191 = int_to_ptr.vmem [resolvable:$true] %s190
          %193 = dma.vmem_to_hbm [thread:$0]  %s191, 128, %s188, %s177
        $region40: #{tpu_custom_call.1} parent=27 // pred_fallthru
          _
      $region28: #{tpu_custom_call.1} parent=5 // pred_fallthru
        _
      %p194 = scmp.le.s32.totalorder 2, %s15
      // Predicated region
      $region41: #{tpu_custom_call.1} parent=5 // pred_check
        %p195 = pneg %p194
      $region42: #{tpu_custom_call.1} parent=5 // pred_check_branch
        %197 = sbr.rel (%p195) target = $region44
      $region43: #{tpu_custom_call.1} parent=5 // pred_region
        %s198 = ssub.s32 %s15, 2
        // Predicated region
        $region45: #{tpu_custom_call.1} parent=43 // pred_check
          %p199 = pneg %p91
        $region46: #{tpu_custom_call.1} parent=43 // pred_check_branch
          %201 = sbr.rel (%p199) target = $region48
        $region47: #{tpu_custom_call.1} parent=43 // pred_region
          %s202 = sand.u32 %s76, 1
          %s203 = scalar_lea.sflag [#allocation4], %s202
          %s204 = sand.u32 %s76, 1
          %s205 = smul.addr %s204, 8
          %s206 = scalar_lea.vmem [#allocation7], %s205
          %207 = dma.done %s203, 128
        $region48: #{tpu_custom_call.1} parent=43 // pred_fallthru
          _
      $region44: #{tpu_custom_call.1} parent=5 // pred_fallthru
        _
    $region6: #{tpu_custom_call.1} parent=1 // loop_footer
      %s19 = sadd.s32 1, %s15
    $region7: #{tpu_custom_call.1} parent=1 // loop_footer_branch
      %14 = sbr.rel target = $region3
    $region8: #{tpu_custom_call.1} parent=1 // loop_exit
      _
    %208 = vsyncpa [#allocation3], 1
    %s209 = scalar_lea.sflag [#allocation3], 1
    %210 = vsyncpa %s209, 1
    %211 = vsyncpa [#allocation6], 1
    %212 = vsyncpa [#allocation4], 1
    %s213 = scalar_lea.sflag [#allocation4], 1
    %214 = vsyncpa %s213, 1

// kernel: tpu_custom_call.1
$region0: #{tpu_custom_call.1}
  #allocation0 [shape = 'u32[]', space=smem, size = 0x4, offset = 0x4, fixed_abs, tag = 'smem constant byte address 0x4 - core index']
  #allocation1 [shape = 'u32[144,128]{1,0:T(1,128)}', space=vmem, size = 0x12000, scoped, tag = 'internal scratch']
  %s0 = inlined_call_operand.hbm [shape: bf16[4,8,128], index: 0, kind: input, shape index: {}]
  %s1 = inlined_call_operand.hbm [shape: f32[4,1,8], index: 1, kind: input, shape index: {}]
  %s2 = inlined_call_operand.hbm [shape: bf16[128,384], index: 2, kind: input, shape index: {}]
  %s3 = inlined_call_operand.vmem [shape: f32[1,384], index: 3, kind: input, shape index: {}]
  %s4 = inlined_call_operand.hbm [shape: bf16[128,128], index: 4, kind: input, shape index: {}]
  %s5 = inlined_call_operand.hbm [shape: bf16[128,256], index: 5, kind: input, shape index: {}]
  %s6 = inlined_call_operand.vmem [shape: f32[1,256], index: 6, kind: input, shape index: {}]
  %s7 = inlined_call_operand.hbm [shape: bf16[256,128], index: 7, kind: input, shape index: {}]
  %s8 = inlined_call_operand.vmem [shape: f32[6,128], index: 8, kind: input, shape index: {}]
  %s9 = inlined_call_operand.hbm [shape: bf16[4,8,128], index: 9, kind: output, shape index: {}]
  %s10 = sld [smem:[#allocation0]]
  $region70: #{tpu_custom_call.1} parent=0
    _
  %s12 = ssub.s32 1, %s10
  %s13 = scalar_select 0, %s12, %s10
  $region1: #{tpu_custom_call.1} parent=0
    #allocation2 [shape = 'u8[8192]{0}', space=vmem, size = 0x2000, scoped, tag = 'input window, operand 0, single buffered']
    #allocation3 [shape = 's32[1]{0}', space=sflag, size = 0x4, scoped, tag = 'scoped memory for tpu_custom_call.1']
    #allocation4 [shape = 's32[1]{0}', space=sflag, size = 0x4, scoped, tag = 'scoped memory for tpu_custom_call.1']
    #allocation5 [shape = 'u8[2048]{0}', space=vmem, size = 0x800, scoped, tag = 'input window, operand 1, single buffered']
    #allocation6 [shape = 's32[1]{0}', space=sflag, size = 0x4, scoped, tag = 'scoped memory for tpu_custom_call.1']
    #allocation7 [shape = 'u8[98304]{0}', space=vmem, size = 0x18000, scoped, tag = 'input window, operand 2, single buffered']
    #allocation8 [shape = 'u8[32768]{0}', space=vmem, size = 0x8000, scoped, tag = 'input window, operand 4, single buffered']
    #allocation9 [shape = 's32[1]{0}', space=sflag, size = 0x4, scoped, tag = 'scoped memory for tpu_custom_call.1']
    #allocation10 [shape = 'u8[65536]{0}', space=vmem, size = 0x10000, scoped, tag = 'input window, operand 5, single buffered']
    #allocation11 [shape = 'u8[65536]{0}', space=vmem, size = 0x10000, scoped, tag = 'input window, operand 7, single buffered']
    #allocation12 [shape = 's32[1]{0}', space=sflag, size = 0x4, scoped, tag = 'scoped memory for tpu_custom_call.1']
    #allocation13 [shape = 'u8[8192]{0}', space=vmem, size = 0x2000, scoped, tag = 'output window, operand 0, single buffered']
    %14 = vsyncpa [#allocation3], 0
    %15 = vsyncpa [#allocation6], 0
    %16 = vsyncpa [#allocation9], 0
    %17 = vsyncpa [#allocation12], 0
    %18 = vsyncpa [#allocation4], 0
    // Predicated region
    $region2: #{tpu_custom_call.1} parent=1 // pred_check
      _
    $region3: #{tpu_custom_call.1} parent=1 // pred_check_branch
      %20 = sbr.rel (0) target = $region5
    $region4: #{tpu_custom_call.1} parent=1 // pred_region
      %s22 = ssub.s32 256, 256
      %23 = vsyncadd [#allocation3], %s22
      %s24 = sshll.u32 [#allocation2], 4
      %s25 = int_to_ptr.vmem [resolvable:$true] %s24
      %30 = dma.hbm_to_vmem [thread:$0]  %s0, 256, %s25, [#allocation3], 64, 64, 4
    $region5: #{tpu_custom_call.1} parent=1 // pred_fallthru
      _
    // Predicated region
    $region6: #{tpu_custom_call.1} parent=1 // pred_check
      _
    $region7: #{tpu_custom_call.1} parent=1 // pred_check_branch
      %32 = sbr.rel (0) target = $region9
    $region8: #{tpu_custom_call.1} parent=1 // pred_region
      %s34 = ssub.s32 64, 64
      %35 = vsyncadd [#allocation6], %s34
      %s36 = sshll.u32 [#allocation5], 4
      %s37 = int_to_ptr.vmem [resolvable:$true] %s36
      %42 = dma.hbm_to_vmem [thread:$0]  %s1, 64, %s37, [#allocation6], 16, 16, 1
    $region9: #{tpu_custom_call.1} parent=1 // pred_fallthru
      _
    // Predicated region
    $region10: #{tpu_custom_call.1} parent=1 // pred_check
      _
    $region11: #{tpu_custom_call.1} parent=1 // pred_check_branch
      %44 = sbr.rel (0) target = $region13
    $region12: #{tpu_custom_call.1} parent=1 // pred_region
      %s46 = ssub.s32 3072, 3072
      %47 = vsyncadd [#allocation6], %s46
      %s48 = sshll.u32 [#allocation7], 4
      %s49 = int_to_ptr.vmem [resolvable:$true] %s48
      %54 = dma.hbm_to_vmem [thread:$0]  %s2, 3072, %s49, [#allocation6], 192, 192, 12
    $region13: #{tpu_custom_call.1} parent=1 // pred_fallthru
      _
    // Predicated region
    $region14: #{tpu_custom_call.1} parent=1 // pred_check
      _
    $region15: #{tpu_custom_call.1} parent=1 // pred_check_branch
      %56 = sbr.rel (0) target = $region17
    $region16: #{tpu_custom_call.1} parent=1 // pred_region
      _
    $region17: #{tpu_custom_call.1} parent=1 // pred_fallthru
      _
    // Predicated region
    $region18: #{tpu_custom_call.1} parent=1 // pred_check
      _
    $region19: #{tpu_custom_call.1} parent=1 // pred_check_branch
      %58 = sbr.rel (0) target = $region21
    $region20: #{tpu_custom_call.1} parent=1 // pred_region
      %s60 = ssub.s32 1024, 1024
      %61 = vsyncadd [#allocation9], %s60
      %s62 = sshll.u32 [#allocation8], 4
      %s63 = int_to_ptr.vmem [resolvable:$true] %s62
      %68 = dma.hbm_to_vmem [thread:$0]  %s4, 1024, %s63, [#allocation9], 64, 64, 4
    $region21: #{tpu_custom_call.1} parent=1 // pred_fallthru
      _
    // Predicated region
    $region22: #{tpu_custom_call.1} parent=1 // pred_check
      _
    $region23: #{tpu_custom_call.1} parent=1 // pred_check_branch
      %70 = sbr.rel (0) target = $region25
    $region24: #{tpu_custom_call.1} parent=1 // pred_region
      %s72 = ssub.s32 2048, 2048
      %73 = vsyncadd [#allocation9], %s72
      %s74 = sshll.u32 [#allocation10], 4
      %s75 = int_to_ptr.vmem [resolvable:$true] %s74
      %80 = dma.hbm_to_vmem [thread:$0]  %s5, 2048, %s75, [#allocation9], 128, 128, 8
    $region25: #{tpu_custom_call.1} parent=1 // pred_fallthru
      _
    // Predicated region
    $region26: #{tpu_custom_call.1} parent=1 // pred_check
      _
    $region27: #{tpu_custom_call.1} parent=1 // pred_check_branch
      %82 = sbr.rel (0) target = $region29
    $region28: #{tpu_custom_call.1} parent=1 // pred_region
      _
    $region29: #{tpu_custom_call.1} parent=1 // pred_fallthru
      _
    // Predicated region
    $region30: #{tpu_custom_call.1} parent=1 // pred_check
      _
    $region31: #{tpu_custom_call.1} parent=1 // pred_check_branch
      %84 = sbr.rel (0) target = $region33
    $region32: #{tpu_custom_call.1} parent=1 // pred_region
      %s86 = ssub.s32 2048, 2048
      %87 = vsyncadd [#allocation12], %s86
      %s88 = sshll.u32 [#allocation11], 4
      %s89 = int_to_ptr.vmem [resolvable:$true] %s88
      %94 = dma.hbm_to_vmem [thread:$0]  %s7, 2048, %s89, [#allocation12], 64, 64, 4
    $region33: #{tpu_custom_call.1} parent=1 // pred_fallthru
      _
    // Predicated region
    $region34: #{tpu_custom_call.1} parent=1 // pred_check
      _
    $region35: #{tpu_custom_call.1} parent=1 // pred_check_branch
      %96 = sbr.rel (0) target = $region37
    $region36: #{tpu_custom_call.1} parent=1 // pred_region
      _
    $region37: #{tpu_custom_call.1} parent=1 // pred_fallthru
      _
    // Predicated region
    $region38: #{tpu_custom_call.1} parent=1 // pred_check
      _
    $region39: #{tpu_custom_call.1} parent=1 // pred_check_branch
      %98 = sbr.rel (0) target = $region41
    $region40: #{tpu_custom_call.1} parent=1 // pred_region
      %99 = dma.done [#allocation3], 256
    $region41: #{tpu_custom_call.1} parent=1 // pred_fallthru
      _
    // Predicated region
    $region42: #{tpu_custom_call.1} parent=1 // pred_check
      _
    $region43: #{tpu_custom_call.1} parent=1 // pred_check_branch
      %101 = sbr.rel (0) target = $region45
    $region44: #{tpu_custom_call.1} parent=1 // pred_region
      %102 = dma.done [#allocation6], 64
    $region45: #{tpu_custom_call.1} parent=1 // pred_fallthru
      _
    // Predicated region
    $region46: #{tpu_custom_call.1} parent=1 // pred_check
      _
    $region47: #{tpu_custom_call.1} parent=1 // pred_check_branch
      %104 = sbr.rel (0) target = $region49
    $region48: #{tpu_custom_call.1} parent=1 // pred_region
      %105 = dma.done [#allocation6], 3072
    $region49: #{tpu_custom_call.1} parent=1 // pred_fallthru
      _
    // Predicated region
    $region50: #{tpu_custom_call.1} parent=1 // pred_check
      _
    $region51: #{tpu_custom_call.1} parent=1 // pred_check_branch
      %107 = sbr.rel (0) target = $region53
    $region52: #{tpu_custom_call.1} parent=1 // pred_region
      %108 = dma.done [#allocation9], 1024
    $region53: #{tpu_custom_call.1} parent=1 // pred_fallthru
      _
    // Predicated region
    $region54: #{tpu_custom_call.1} parent=1 // pred_check
      _
    $region55: #{tpu_custom_call.1} parent=1 // pred_check_branch
      %110 = sbr.rel (0) target = $region57
    $region56: #{tpu_custom_call.1} parent=1 // pred_region
      %111 = dma.done [#allocation9], 2048
    $region57: #{tpu_custom_call.1} parent=1 // pred_fallthru
      _
    // Predicated region
    $region58: #{tpu_custom_call.1} parent=1 // pred_check
      _
    $region59: #{tpu_custom_call.1} parent=1 // pred_check_branch
      %113 = sbr.rel (0) target = $region61
    $region60: #{tpu_custom_call.1} parent=1 // pred_region
      %114 = dma.done [#allocation12], 2048
    $region61: #{tpu_custom_call.1} parent=1 // pred_fallthru
      _
    %v116 = vld [vmem:[#allocation2] sm:$0xf]
    %v117 = vld [vmem:[#allocation2 + $0x4] sm:$0xf]
    %v118 = vld [vmem:[#allocation2 + $0x8] sm:$0xf]
    %v119 = vld [vmem:[#allocation2 + $0xc] sm:$0xf]
    %v120 = vld [vmem:[#allocation5] sm:$0x1]
    %v121 = vld [vmem:[#allocation5 + $0x1] sm:$0x1]
    %v122 = vld [vmem:[#allocation5 + $0x2] sm:$0x1]
    %v123 = vld [vmem:[#allocation5 + $0x3] sm:$0x1]
    %v124 = vld [vmem:[%s8] sm:$0x3f]
    %v125 = vld [vmem:[#allocation7] sm:$0xff]
    %v126 = vld [vmem:[#allocation7 + $0x8] sm:$0xf]
    %v127 = vld [vmem:[#allocation7 + $0xc] sm:$0xff]
    %v128 = vld [vmem:[#allocation7 + $0x14] sm:$0xf]
    %v129 = vld [vmem:[#allocation7 + $0x18] sm:$0xff]
    %v130 = vld [vmem:[#allocation7 + $0x20] sm:$0xf]
    %v131 = vld [vmem:[#allocation7 + $0x24] sm:$0xff]
    %v132 = vld [vmem:[#allocation7 + $0x2c] sm:$0xf]
    %v133 = vld [vmem:[#allocation7 + $0x30] sm:$0xff]
    %v134 = vld [vmem:[#allocation7 + $0x38] sm:$0xf]
    %v135 = vld [vmem:[#allocation7 + $0x3c] sm:$0xff]
    %v136 = vld [vmem:[#allocation7 + $0x44] sm:$0xf]
    %v137 = vld [vmem:[#allocation7 + $0x48] sm:$0xff]
    %v138 = vld [vmem:[#allocation7 + $0x50] sm:$0xf]
    %v139 = vld [vmem:[#allocation7 + $0x54] sm:$0xff]
    %v140 = vld [vmem:[#allocation7 + $0x5c] sm:$0xf]
    %v141 = vld [vmem:[#allocation7 + $0x60] sm:$0xff]
    %v142 = vld [vmem:[#allocation7 + $0x68] sm:$0xf]
    %v143 = vld [vmem:[#allocation7 + $0x6c] sm:$0xff]
    %v144 = vld [vmem:[#allocation7 + $0x74] sm:$0xf]
    %v145 = vld [vmem:[#allocation7 + $0x78] sm:$0xff]
    %v146 = vld [vmem:[#allocation7 + $0x80] sm:$0xf]
    %v147 = vld [vmem:[#allocation7 + $0x84] sm:$0xff]
    %v148 = vld [vmem:[#allocation7 + $0x8c] sm:$0xf]
    %v149 = vld [vmem:[#allocation7 + $0x90] sm:$0xff]
    %v150 = vld [vmem:[#allocation7 + $0x98] sm:$0xf]
    %v151 = vld [vmem:[#allocation7 + $0x9c] sm:$0xff]
    %v152 = vld [vmem:[#allocation7 + $0xa4] sm:$0xf]
    %v153 = vld [vmem:[#allocation7 + $0xa8] sm:$0xff]
    %v154 = vld [vmem:[#allocation7 + $0xb0] sm:$0xf]
    %v155 = vld [vmem:[#allocation7 + $0xb4] sm:$0xff]
    %v156 = vld [vmem:[#allocation7 + $0xbc] sm:$0xf]
    %v157 = vld [vmem:[%s3] sm:$0x7]
    %v159 = vlaneseq
    %v160 = vshrl.u32 %v159, 7
    %v161 = vsub.s32 0, %v160
    %v162 = vrot.slane %v157, %v161
    %v163 = vlaneseq
    %v164 = vshrl.u32 %v163, 7
    %v165 = vsub.s32 1, %v164
    %v166 = vrot.slane %v157, %v165
    %v167 = vlaneseq
    %v168 = vshrl.u32 %v167, 7
    %v169 = vsub.s32 2, %v168
    %v170 = vrot.slane %v157, %v169
    %v178 = vunpack.c.l.b16 %v116
    %v179 = vunpack.c.l.b16 %v117
    %v180 = vunpack.c.l.b16 %v118
    %v181 = vunpack.c.l.b16 %v119
    %v182 = vpack.c.b16 %v179, %v178
    %v183 = vpack.c.b16 %v181, %v180
    %v218 = vunpack.c.l.b16 %v125
    %v219 = vunpack.c.h.b16 %v125
    %v220 = vunpack.c.l.b16 %v126
    %v221 = vunpack.c.l.b16 %v127
    %v222 = vunpack.c.h.b16 %v127
    %v223 = vunpack.c.l.b16 %v128
    %v224 = vunpack.c.l.b16 %v129
    %v225 = vunpack.c.h.b16 %v129
    %v226 = vunpack.c.l.b16 %v130
    %v227 = vunpack.c.l.b16 %v131
    %v228 = vunpack.c.h.b16 %v131
    %v229 = vunpack.c.l.b16 %v132
    %v230 = vunpack.c.l.b16 %v133
    %v231 = vunpack.c.h.b16 %v133
    %v232 = vunpack.c.l.b16 %v134
    %v233 = vunpack.c.l.b16 %v135
    %v234 = vunpack.c.h.b16 %v135
    %v235 = vunpack.c.l.b16 %v136
    %v236 = vunpack.c.l.b16 %v137
    %v237 = vunpack.c.h.b16 %v137
    %v238 = vunpack.c.l.b16 %v138
    %v239 = vunpack.c.l.b16 %v139
    %v240 = vunpack.c.h.b16 %v139
    %v241 = vunpack.c.l.b16 %v140
    %v242 = vunpack.c.l.b16 %v141
    %v243 = vunpack.c.h.b16 %v141
    %v244 = vunpack.c.l.b16 %v142
    %v245 = vunpack.c.l.b16 %v143
    %v246 = vunpack.c.h.b16 %v143
    %v247 = vunpack.c.l.b16 %v144
    %v248 = vunpack.c.l.b16 %v145
    %v249 = vunpack.c.h.b16 %v145
    %v250 = vunpack.c.l.b16 %v146
    %v251 = vunpack.c.l.b16 %v147
    %v252 = vunpack.c.h.b16 %v147
    %v253 = vunpack.c.l.b16 %v148
    %v254 = vunpack.c.l.b16 %v149
    %v255 = vunpack.c.h.b16 %v149
    %v256 = vunpack.c.l.b16 %v150
    %v257 = vunpack.c.l.b16 %v151
    %v258 = vunpack.c.h.b16 %v151
    %v259 = vunpack.c.l.b16 %v152
    %v260 = vunpack.c.l.b16 %v153
    %v261 = vunpack.c.h.b16 %v153
    %v262 = vunpack.c.l.b16 %v154
    %v263 = vunpack.c.l.b16 %v155
    %v264 = vunpack.c.h.b16 %v155
    %v265 = vunpack.c.l.b16 %v156
    %v266 = vpack.c.b16 %v221, %v218
    %v267 = vpack.c.b16 %v222, %v219
    %v268 = vpack.c.b16 %v223, %v220
    %v269 = vpack.c.b16 %v227, %v224
    %v270 = vpack.c.b16 %v228, %v225
    %v271 = vpack.c.b16 %v229, %v226
    %v272 = vpack.c.b16 %v233, %v230
    %v273 = vpack.c.b16 %v234, %v231
    %v274 = vpack.c.b16 %v235, %v232
    %v275 = vpack.c.b16 %v239, %v236
    %v276 = vpack.c.b16 %v240, %v237
    %v277 = vpack.c.b16 %v241, %v238
    %v278 = vpack.c.b16 %v245, %v242
    %v279 = vpack.c.b16 %v246, %v243
    %v280 = vpack.c.b16 %v247, %v244
    %v281 = vpack.c.b16 %v251, %v248
    %v282 = vpack.c.b16 %v252, %v249
    %v283 = vpack.c.b16 %v253, %v250
    %v284 = vpack.c.b16 %v257, %v254
    %v285 = vpack.c.b16 %v258, %v255
    %v286 = vpack.c.b16 %v259, %v256
    %v287 = vpack.c.b16 %v263, %v260
    %v288 = vpack.c.b16 %v264, %v261
    %v289 = vpack.c.b16 %v265, %v262
    %314 = vmatprep.subr.bf16.mxu0 %v267
    %315 = vmatpush1.bf16.msra.mxu0 %v266
    %316 = vmatprep.subr.bf16.mxu0 %v270
    %317 = vmatpush1.bf16.msra.mxu0 %v269
    %318 = vmatprep.subr.bf16.mxu0 %v273
    %319 = vmatpush1.bf16.msra.mxu0 %v272
    %320 = vmatprep.subr.bf16.mxu0 %v276
    %321 = vmatpush1.bf16.msra.mxu0 %v275
    %322 = vmatprep.subr.bf16.mxu0 %v279
    %323 = vmatpush1.bf16.msra.mxu0 %v278
    %324 = vmatprep.subr.bf16.mxu0 %v282
    %325 = vmatpush1.bf16.msra.mxu0 %v281
    %326 = vmatprep.subr.bf16.mxu0 %v285
    %327 = vmatpush1.bf16.msra.mxu0 %v284
    %328 = vmatprep.subr.bf16.mxu0 %v288
    %329 = vmatpush1.bf16.msra.mxu0 %v287
    %330 = vmatprep.subr.bf16.mxu0 0
    %331 = vmatpush1.bf16.msra.mxu0 0
    %332 = vmatprep.subr.bf16.mxu0 0
    %333 = vmatpush1.bf16.msra.mxu0 0
    %334 = vmatprep.subr.bf16.mxu0 0
    %335 = vmatpush1.bf16.msra.mxu0 0
    %336 = vmatprep.subr.bf16.mxu0 0
    %337 = vmatpush1.bf16.msra.mxu0 0
    %338 = vmatprep.subr.bf16.mxu0 0
    %339 = vmatpush1.bf16.msra.mxu0 0
    %340 = vmatprep.subr.bf16.mxu0 0
    %341 = vmatpush1.bf16.msra.mxu0 0
    %342 = vmatprep.subr.bf16.mxu0 0
    %343 = vmatpush1.bf16.msra.mxu0 0
    %344 = vmatprep.subr.bf16.mxu0 0
    %345 = vmatpush1.bf16.msra.mxu0 0
    %346 = vmatprep.mubr.bf16.mxu0 0
    %347 = vmatmul.mubr.bf16.gmra.mrb[0].mxu0 %v182
    %v348 = vpop.f32.mrb[0].mxu0
    %v349 = vadd.f32 %v162, %v348
    %v350 = vpop.f32.mrb[0].mxu0
    %v351 = vadd.f32 %v166, %v350
    %v352 = vpop.f32.mrb[0].mxu0
    %v353 = vadd.f32 %v162, %v352
    %v354 = vpop.f32.mrb[0].mxu0
    %v355 = vadd.f32 %v166, %v354
    %356 = vmatprep.mubr.bf16.mxu0 0
    %357 = vmatmul.mubr.bf16.gmra.mrb[0].mxu0 %v183
    %v358 = vpop.f32.mrb[0].mxu0
    %v359 = vadd.f32 %v162, %v358
    %v360 = vpop.f32.mrb[0].mxu0
    %v361 = vadd.f32 %v166, %v360
    %v362 = vpop.f32.mrb[0].mxu0
    %v363 = vadd.f32 %v162, %v362
    %v364 = vpop.f32.mrb[0].mxu0
    %v365 = vadd.f32 %v166, %v364
    %366 = vdwg.mxu0
    %367 = vmatprep.subr.bf16.mxu0 0
    %368 = vmatpush1.bf16.msra.mxu0 %v268
    %369 = vmatprep.subr.bf16.mxu0 0
    %370 = vmatpush1.bf16.msra.mxu0 %v271
    %371 = vmatprep.subr.bf16.mxu0 0
    %372 = vmatpush1.bf16.msra.mxu0 %v274
    %373 = vmatprep.subr.bf16.mxu0 0
    %374 = vmatpush1.bf16.msra.mxu0 %v277
    %375 = vmatprep.subr.bf16.mxu0 0
    %376 = vmatpush1.bf16.msra.mxu0 %v280
    %377 = vmatprep.subr.bf16.mxu0 0
    %378 = vmatpush1.bf16.msra.mxu0 %v283
    %379 = vmatprep.subr.bf16.mxu0 0
    %380 = vmatpush1.bf16.msra.mxu0 %v286
    %381 = vmatprep.subr.bf16.mxu0 0
    %382 = vmatpush1.bf16.msra.mxu0 %v289
    %383 = vmatprep.subr.bf16.mxu0 0
    %384 = vmatpush1.bf16.msra.mxu0 0
    %385 = vmatprep.subr.bf16.mxu0 0
    %386 = vmatpush1.bf16.msra.mxu0 0
    %387 = vmatprep.subr.bf16.mxu0 0
    %388 = vmatpush1.bf16.msra.mxu0 0
    %389 = vmatprep.subr.bf16.mxu0 0
    %390 = vmatpush1.bf16.msra.mxu0 0
    %391 = vmatprep.subr.bf16.mxu0 0
    %392 = vmatpush1.bf16.msra.mxu0 0
    %393 = vmatprep.subr.bf16.mxu0 0
    %394 = vmatpush1.bf16.msra.mxu0 0
    %395 = vmatprep.subr.bf16.mxu0 0
    %396 = vmatpush1.bf16.msra.mxu0 0
    %397 = vmatprep.subr.bf16.mxu0 0
    %398 = vmatpush1.bf16.msra.mxu0 0
    %399 = vmatprep.mubr.bf16.mxu0 0
    %400 = vmatmul.mubr.bf16.gmra.mrb[0].mxu0 %v182
    %v401 = vpop.f32.mrb[0].mxu0
    %v402 = vadd.f32 %v170, %v401
    %v403 = vpop.f32.mrb[0].mxu0
    %v404 = vpop.f32.mrb[0].mxu0
    %v405 = vadd.f32 %v170, %v404
    %v406 = vpop.f32.mrb[0].mxu0
    %407 = vmatprep.mubr.bf16.mxu0 0
    %408 = vmatmul.mubr.bf16.gmra.mrb[0].mxu0 %v183
    %v409 = vpop.f32.mrb[0].mxu0
    %v410 = vadd.f32 %v170, %v409
    %v411 = vpop.f32.mrb[0].mxu0
    %v412 = vpop.f32.mrb[0].mxu0
    %v413 = vadd.f32 %v170, %v412
    %v414 = vpop.f32.mrb[0].mxu0
    %415 = vdwg.mxu0
    %v416 = vpack.c.bf16 %v353, %v349
    %v417 = vpack.c.bf16 %v355, %v351
    %v418 = vpack.c.bf16 %v405, %v402
    %v419 = vpack.c.bf16 %v363, %v359
    %v420 = vpack.c.bf16 %v365, %v361
    %v421 = vpack.c.bf16 %v413, %v410
    %v424 = vunpack.c.l.b16 %v416
    %v425 = vunpack.c.h.b16 %v416
    %v426 = vunpack.c.l.b16 %v419
    %v427 = vunpack.c.h.b16 %v419
    %v428 = vpack.c.b16 %v424, %v424
    %v429 = vpack.c.b16 %v425, %v425
    %v430 = vpack.c.b16 %v426, %v426
    %v431 = vpack.c.b16 %v427, %v427
    %v438 = vunpack.c.l.b16 %v417
    %v439 = vunpack.c.h.b16 %v417
    %v440 = vunpack.c.l.b16 %v420
    %v441 = vunpack.c.h.b16 %v420
    %v442 = vpack.c.b16 %v438, %v438
    %v443 = vpack.c.b16 %v439, %v439
    %v444 = vpack.c.b16 %v440, %v440
    %v445 = vpack.c.b16 %v441, %v441
    %v452 = vunpack.c.l.b16 %v418
    %v453 = vunpack.c.h.b16 %v418
    %v454 = vunpack.c.l.b16 %v421
    %v455 = vunpack.c.h.b16 %v421
    %v456 = vpack.c.b16 %v452, %v452
    %v457 = vpack.c.b16 %v453, %v453
    %v458 = vpack.c.b16 %v454, %v454
    %v459 = vpack.c.b16 %v455, %v455
    %460 = vmatprep.subr.bf16.mxu0 0
    %461 = vmatpush1.bf16.xpose.msra.mxu0 %v442
    %462 = vmatprep.subr.bf16.mxu0 0
    %463 = vmatpush1.bf16.xpose.msra.mxu0 0
    %464 = vmatprep.subr.bf16.mxu0 0
    %465 = vmatpush1.bf16.xpose.msra.mxu0 0
    %466 = vmatprep.subr.bf16.mxu0 0
    %467 = vmatpush1.bf16.xpose.msra.mxu0 0
    %468 = vmatprep.subr.bf16.mxu0 0
    %469 = vmatpush1.bf16.xpose.msra.mxu0 0
    %470 = vmatprep.subr.bf16.mxu0 0
    %471 = vmatpush1.bf16.xpose.msra.mxu0 0
    %472 = vmatprep.subr.bf16.mxu0 0
    %473 = vmatpush1.bf16.xpose.msra.mxu0 0
    %474 = vmatprep.subr.bf16.mxu0 0
    %475 = vmatpush1.bf16.xpose.msra.mxu0 0
    %476 = vmatprep.subr.bf16.mxu0 0
    %477 = vmatpush1.bf16.xpose.msra.mxu0 0
    %478 = vmatprep.subr.bf16.mxu0 0
    %479 = vmatpush1.bf16.xpose.msra.mxu0 0
    %480 = vmatprep.subr.bf16.mxu0 0
    %481 = vmatpush1.bf16.xpose.msra.mxu0 0
    %482 = vmatprep.subr.bf16.mxu0 0
    %483 = vmatpush1.bf16.xpose.msra.mxu0 0
    %484 = vmatprep.subr.bf16.mxu0 0
    %485 = vmatpush1.bf16.xpose.msra.mxu0 0
    %486 = vmatprep.subr.bf16.mxu0 0
    %487 = vmatpush1.bf16.xpose.msra.mxu0 0
    %488 = vmatprep.subr.bf16.mxu0 0
    %489 = vmatpush1.bf16.xpose.msra.mxu0 0
    %490 = vmatprep.subr.bf16.mxu0 0
    %491 = vmatpush1.bf16.xpose.msra.mxu0 0
    %492 = vmatprep.mubr.bf16.mxu0 0
    %493 = vmatmul.mubr.bf16.gmra.mrb[0].mxu0 %v428
    %v494 = vpop.f32.mrb[0].mxu0
    %v495 = vadd.f32 0.0, %v494
    %v496 = vpop.f32.mrb[0].mxu0
    %v497 = vpop.f32.mrb[0].mxu0
    %v498 = vpop.f32.mrb[0].mxu0
    %499 = vdwg.mxu0
    %500 = vmatprep.subr.bf16.mxu0 0
    %501 = vmatpush1.bf16.xpose.msra.mxu0 %v443
    %502 = vmatprep.subr.bf16.mxu0 0
    %503 = vmatpush1.bf16.xpose.msra.mxu0 0
    %504 = vmatprep.subr.bf16.mxu0 0
    %505 = vmatpush1.bf16.xpose.msra.mxu0 0
    %506 = vmatprep.subr.bf16.mxu0 0
    %507 = vmatpush1.bf16.xpose.msra.mxu0 0
    %508 = vmatprep.subr.bf16.mxu0 0
    %509 = vmatpush1.bf16.xpose.msra.mxu0 0
    %510 = vmatprep.subr.bf16.mxu0 0
    %511 = vmatpush1.bf16.xpose.msra.mxu0 0
    %512 = vmatprep.subr.bf16.mxu0 0
    %513 = vmatpush1.bf16.xpose.msra.mxu0 0
    %514 = vmatprep.subr.bf16.mxu0 0
    %515 = vmatpush1.bf16.xpose.msra.mxu0 0
    %516 = vmatprep.subr.bf16.mxu0 0
    %517 = vmatpush1.bf16.xpose.msra.mxu0 0
    %518 = vmatprep.subr.bf16.mxu0 0
    %519 = vmatpush1.bf16.xpose.msra.mxu0 0
    %520 = vmatprep.subr.bf16.mxu0 0
    %521 = vmatpush1.bf16.xpose.msra.mxu0 0
    %522 = vmatprep.subr.bf16.mxu0 0
    %523 = vmatpush1.bf16.xpose.msra.mxu0 0
    %524 = vmatprep.subr.bf16.mxu0 0
    %525 = vmatpush1.bf16.xpose.msra.mxu0 0
    %526 = vmatprep.subr.bf16.mxu0 0
    %527 = vmatpush1.bf16.xpose.msra.mxu0 0
    %528 = vmatprep.subr.bf16.mxu0 0
    %529 = vmatpush1.bf16.xpose.msra.mxu0 0
    %530 = vmatprep.subr.bf16.mxu0 0
    %531 = vmatpush1.bf16.xpose.msra.mxu0 0
    %532 = vmatprep.mubr.bf16.mxu0 0
    %533 = vmatmul.mubr.bf16.gmra.mrb[0].mxu0 %v429
    %v534 = vpop.f32.mrb[0].mxu0
    %v535 = vadd.f32 0.0, %v534
    %v536 = vpop.f32.mrb[0].mxu0
    %v537 = vpop.f32.mrb[0].mxu0
    %v538 = vpop.f32.mrb[0].mxu0
    %539 = vdwg.mxu0
    %540 = vmatprep.subr.bf16.mxu0 0
    %541 = vmatpush1.bf16.xpose.msra.mxu0 %v444
    %542 = vmatprep.subr.bf16.mxu0 0
    %543 = vmatpush1.bf16.xpose.msra.mxu0 0
    %544 = vmatprep.subr.bf16.mxu0 0
    %545 = vmatpush1.bf16.xpose.msra.mxu0 0
    %546 = vmatprep.subr.bf16.mxu0 0
    %547 = vmatpush1.bf16.xpose.msra.mxu0 0
    %548 = vmatprep.subr.bf16.mxu0 0
    %549 = vmatpush1.bf16.xpose.msra.mxu0 0
    %550 = vmatprep.subr.bf16.mxu0 0
    %551 = vmatpush1.bf16.xpose.msra.mxu0 0
    %552 = vmatprep.subr.bf16.mxu0 0
    %553 = vmatpush1.bf16.xpose.msra.mxu0 0
    %554 = vmatprep.subr.bf16.mxu0 0
    %555 = vmatpush1.bf16.xpose.msra.mxu0 0
    %556 = vmatprep.subr.bf16.mxu0 0
    %557 = vmatpush1.bf16.xpose.msra.mxu0 0
    %558 = vmatprep.subr.bf16.mxu0 0
    %559 = vmatpush1.bf16.xpose.msra.mxu0 0
    %560 = vmatprep.subr.bf16.mxu0 0
    %561 = vmatpush1.bf16.xpose.msra.mxu0 0
    %562 = vmatprep.subr.bf16.mxu0 0
    %563 = vmatpush1.bf16.xpose.msra.mxu0 0
    %564 = vmatprep.subr.bf16.mxu0 0
    %565 = vmatpush1.bf16.xpose.msra.mxu0 0
    %566 = vmatprep.subr.bf16.mxu0 0
    %567 = vmatpush1.bf16.xpose.msra.mxu0 0
    %568 = vmatprep.subr.bf16.mxu0 0
    %569 = vmatpush1.bf16.xpose.msra.mxu0 0
    %570 = vmatprep.subr.bf16.mxu0 0
    %571 = vmatpush1.bf16.xpose.msra.mxu0 0
    %572 = vmatprep.mubr.bf16.mxu0 0
    %573 = vmatmul.mubr.bf16.gmra.mrb[0].mxu0 %v430
    %v574 = vpop.f32.mrb[0].mxu0
    %v575 = vadd.f32 0.0, %v574
    %v576 = vpop.f32.mrb[0].mxu0
    %v577 = vpop.f32.mrb[0].mxu0
    %v578 = vpop.f32.mrb[0].mxu0
    %579 = vdwg.mxu0
    %580 = vmatprep.subr.bf16.mxu0 0
    %581 = vmatpush1.bf16.xpose.msra.mxu0 %v445
    %582 = vmatprep.subr.bf16.mxu0 0
    %583 = vmatpush1.bf16.xpose.msra.mxu0 0
    %584 = vmatprep.subr.bf16.mxu0 0
    %585 = vmatpush1.bf16.xpose.msra.mxu0 0
    %586 = vmatprep.subr.bf16.mxu0 0
    %587 = vmatpush1.bf16.xpose.msra.mxu0 0
    %588 = vmatprep.subr.bf16.mxu0 0
    %589 = vmatpush1.bf16.xpose.msra.mxu0 0
    %590 = vmatprep.subr.bf16.mxu0 0
    %591 = vmatpush1.bf16.xpose.msra.mxu0 0
    %592 = vmatprep.subr.bf16.mxu0 0
    %593 = vmatpush1.bf16.xpose.msra.mxu0 0
    %594 = vmatprep.subr.bf16.mxu0 0
    %595 = vmatpush1.bf16.xpose.msra.mxu0 0
    %596 = vmatprep.subr.bf16.mxu0 0
    %597 = vmatpush1.bf16.xpose.msra.mxu0 0
    %598 = vmatprep.subr.bf16.mxu0 0
    %599 = vmatpush1.bf16.xpose.msra.mxu0 0
    %600 = vmatprep.subr.bf16.mxu0 0
    %601 = vmatpush1.bf16.xpose.msra.mxu0 0
    %602 = vmatprep.subr.bf16.mxu0 0
    %603 = vmatpush1.bf16.xpose.msra.mxu0 0
    %604 = vmatprep.subr.bf16.mxu0 0
    %605 = vmatpush1.bf16.xpose.msra.mxu0 0
    %606 = vmatprep.subr.bf16.mxu0 0
    %607 = vmatpush1.bf16.xpose.msra.mxu0 0
    %608 = vmatprep.subr.bf16.mxu0 0
    %609 = vmatpush1.bf16.xpose.msra.mxu0 0
    %610 = vmatprep.subr.bf16.mxu0 0
    %611 = vmatpush1.bf16.xpose.msra.mxu0 0
    %612 = vmatprep.mubr.bf16.mxu0 0
    %613 = vmatmul.mubr.bf16.gmra.mrb[0].mxu0 %v431
    %v614 = vpop.f32.mrb[0].mxu0
    %v615 = vadd.f32 0.0, %v614
    %v616 = vpop.f32.mrb[0].mxu0
    %v617 = vpop.f32.mrb[0].mxu0
    %v618 = vpop.f32.mrb[0].mxu0
    %619 = vdwg.mxu0
    %v620 = vmul.f32 %v495, 0.088388346
    %v621 = vmul.f32 %v535, 0.088388346
    %v622 = vmul.f32 %v575, 0.088388346
    %v623 = vmul.f32 %v615, 0.088388346
    %v624 = vsub.f32 %v120, 1.0
    %v625 = vsub.f32 %v121, 1.0
    %v626 = vsub.f32 %v122, 1.0
    %v627 = vsub.f32 %v123, 1.0
    %v628 = vmul.f32 %v624, 1e+09
    %v629 = vmul.f32 %v625, 1e+09
    %v630 = vmul.f32 %v626, 1e+09
    %v631 = vmul.f32 %v627, 1e+09
    %v636 = vlaneseq
    %v637 = vshrl.u32 %v636, 7
    %v638 = vsub.s32 0, %v637
    %v639 = vrot.slane %v628, %v638
    %v640 = vlaneseq
    %v641 = vshrl.u32 %v640, 7
    %v642 = vsub.s32 0, %v641
    %v643 = vrot.slane %v629, %v642
    %v644 = vlaneseq
    %v645 = vshrl.u32 %v644, 7
    %v646 = vsub.s32 0, %v645
    %v647 = vrot.slane %v630, %v646
    %v648 = vlaneseq
    %v649 = vshrl.u32 %v648, 7
    %v650 = vsub.s32 0, %v649
    %v651 = vrot.slane %v631, %v650
    %v656 = vadd.f32 %v620, %v639
    %v657 = vadd.f32 %v621, %v643
    %v658 = vadd.f32 %v622, %v647
    %v659 = vadd.f32 %v623, %v651
    %vm660 = vcmask 64512
    %v661 = vsel %vm660, %v656, -inf
    %662 = vmax.xlane.f32.xlu0 %v661
    %v663 = vpop.xlane.xlu0 %662
    %v664 = vsel %vm660, %v657, -inf
    %665 = vmax.xlane.f32.xlu0 %v664
    %v666 = vpop.xlane.xlu0 %665
    %v667 = vsel %vm660, %v658, -inf
    %668 = vmax.xlane.f32.xlu0 %v667
    %v669 = vpop.xlane.xlu0 %668
    %v670 = vsel %vm660, %v659, -inf
    %671 = vmax.xlane.f32.xlu0 %v670
    %v672 = vpop.xlane.xlu0 %671
    %v673 = vsub.f32 %v656, %v663
    %v674 = vsub.f32 %v657, %v666
    %v675 = vsub.f32 %v658, %v669
    %v676 = vsub.f32 %v659, %v672
    %v677 = vmul.f32 %v673, 1.442695
    %v678 = vpow.pop %v677
    %v679 = vmul.f32 %v674, 1.442695
    %v680 = vpow.pop %v679
    %v681 = vmul.f32 %v675, 1.442695
    %v682 = vpow.pop %v681
    %v683 = vmul.f32 %v676, 1.442695
    %v684 = vpow.pop %v683
    %v685 = vsel %vm660, %v678, 0.0
    %686 = vadd.xlane.f32.xlu0 %v685
    %v687 = vpop.xlane.xlu0 %686
    %v688 = vsel %vm660, %v680, 0.0
    %689 = vadd.xlane.f32.xlu0 %v688
    %v690 = vpop.xlane.xlu0 %689
    %v691 = vsel %vm660, %v682, 0.0
    %692 = vadd.xlane.f32.xlu0 %v691
    %v693 = vpop.xlane.xlu0 %692
    %v694 = vsel %vm660, %v684, 0.0
    %695 = vadd.xlane.f32.xlu0 %v694
    %v696 = vpop.xlane.xlu0 %695
    %v697 = vrcp.pop %v687
    %v698 = vrcp.pop %v690
    %v699 = vrcp.pop %v693
    %v700 = vrcp.pop %v696
    %v701 = vmul.f32 %v678, %v697
    %v702 = vmul.f32 %v680, %v698
    %v703 = vmul.f32 %v682, %v699
    %v704 = vmul.f32 %v684, %v700
    %v705 = vpack.c.bf16 %v701, %v701
    %v706 = vpack.c.bf16 %v702, %v702
    %v707 = vpack.c.bf16 %v703, %v703
    %v708 = vpack.c.bf16 %v704, %v704
    %v710 = vsel %vm660, %v705, 0
    %vm712 = vcmask 1043456
    %v714 = vsel %vm712, %v456, 0
    %716 = vmatprep.subr.bf16.mxu0 0
    %717 = vmatpush1.bf16.msra.mxu0 %v714
    %718 = vmatprep.subr.bf16.mxu0 0
    %719 = vmatpush1.bf16.msra.mxu0 0
    %720 = vmatprep.subr.bf16.mxu0 0
    %721 = vmatpush1.bf16.msra.mxu0 0
    %722 = vmatprep.subr.bf16.mxu0 0
    %723 = vmatpush1.bf16.msra.mxu0 0
    %724 = vmatprep.subr.bf16.mxu0 0
    %725 = vmatpush1.bf16.msra.mxu0 0
    %726 = vmatprep.subr.bf16.mxu0 0
    %727 = vmatpush1.bf16.msra.mxu0 0
    %728 = vmatprep.subr.bf16.mxu0 0
    %729 = vmatpush1.bf16.msra.mxu0 0
    %730 = vmatprep.subr.bf16.mxu0 0
    %731 = vmatpush1.bf16.msra.mxu0 0
    %732 = vmatprep.subr.bf16.mxu0 0
    %733 = vmatpush1.bf16.msra.mxu0 0
    %734 = vmatprep.subr.bf16.mxu0 0
    %735 = vmatpush1.bf16.msra.mxu0 0
    %736 = vmatprep.subr.bf16.mxu0 0
    %737 = vmatpush1.bf16.msra.mxu0 0
    %738 = vmatprep.subr.bf16.mxu0 0
    %739 = vmatpush1.bf16.msra.mxu0 0
    %740 = vmatprep.subr.bf16.mxu0 0
    %741 = vmatpush1.bf16.msra.mxu0 0
    %742 = vmatprep.subr.bf16.mxu0 0
    %743 = vmatpush1.bf16.msra.mxu0 0
    %744 = vmatprep.subr.bf16.mxu0 0
    %745 = vmatpush1.bf16.msra.mxu0 0
    %746 = vmatprep.subr.bf16.mxu0 0
    %747 = vmatpush1.bf16.msra.mxu0 0
    %748 = vmatprep.mubr.bf16.mxu0 0
    %749 = vmatmul.mubr.bf16.gmra.mrb[0].mxu0 %v710
    %v750 = vpop.f32.mrb[0].mxu0
    %v751 = vadd.f32 0.0, %v750
    %v752 = vpop.f32.mrb[0].mxu0
    %v753 = vpop.f32.mrb[0].mxu0
    %v754 = vpop.f32.mrb[0].mxu0
    %755 = vdwg.mxu0
    %v757 = vsel %vm660, %v706, 0
    %v760 = vsel %vm712, %v457, 0
    %762 = vmatprep.subr.bf16.mxu0 0
    %763 = vmatpush1.bf16.msra.mxu0 %v760
    %764 = vmatprep.subr.bf16.mxu0 0
    %765 = vmatpush1.bf16.msra.mxu0 0
    %766 = vmatprep.subr.bf16.mxu0 0
    %767 = vmatpush1.bf16.msra.mxu0 0
    %768 = vmatprep.subr.bf16.mxu0 0
    %769 = vmatpush1.bf16.msra.mxu0 0
    %770 = vmatprep.subr.bf16.mxu0 0
    %771 = vmatpush1.bf16.msra.mxu0 0
    %772 = vmatprep.subr.bf16.mxu0 0
    %773 = vmatpush1.bf16.msra.mxu0 0
    %774 = vmatprep.subr.bf16.mxu0 0
    %775 = vmatpush1.bf16.msra.mxu0 0
    %776 = vmatprep.subr.bf16.mxu0 0
    %777 = vmatpush1.bf16.msra.mxu0 0
    %778 = vmatprep.subr.bf16.mxu0 0
    %779 = vmatpush1.bf16.msra.mxu0 0
    %780 = vmatprep.subr.bf16.mxu0 0
    %781 = vmatpush1.bf16.msra.mxu0 0
    %782 = vmatprep.subr.bf16.mxu0 0
    %783 = vmatpush1.bf16.msra.mxu0 0
    %784 = vmatprep.subr.bf16.mxu0 0
    %785 = vmatpush1.bf16.msra.mxu0 0
    %786 = vmatprep.subr.bf16.mxu0 0
    %787 = vmatpush1.bf16.msra.mxu0 0
    %788 = vmatprep.subr.bf16.mxu0 0
    %789 = vmatpush1.bf16.msra.mxu0 0
    %790 = vmatprep.subr.bf16.mxu0 0
    %791 = vmatpush1.bf16.msra.mxu0 0
    %792 = vmatprep.subr.bf16.mxu0 0
    %793 = vmatpush1.bf16.msra.mxu0 0
    %794 = vmatprep.mubr.bf16.mxu0 0
    %795 = vmatmul.mubr.bf16.gmra.mrb[0].mxu0 %v757
    %v796 = vpop.f32.mrb[0].mxu0
    %v797 = vadd.f32 0.0, %v796
    %v798 = vpop.f32.mrb[0].mxu0
    %v799 = vpop.f32.mrb[0].mxu0
    %v800 = vpop.f32.mrb[0].mxu0
    %801 = vdwg.mxu0
    %v803 = vsel %vm660, %v707, 0
    %v806 = vsel %vm712, %v458, 0
    %808 = vmatprep.subr.bf16.mxu0 0
    %809 = vmatpush1.bf16.msra.mxu0 %v806
    %810 = vmatprep.subr.bf16.mxu0 0
    %811 = vmatpush1.bf16.msra.mxu0 0
    %812 = vmatprep.subr.bf16.mxu0 0
    %813 = vmatpush1.bf16.msra.mxu0 0
    %814 = vmatprep.subr.bf16.mxu0 0
    %815 = vmatpush1.bf16.msra.mxu0 0
    %816 = vmatprep.subr.bf16.mxu0 0
    %817 = vmatpush1.bf16.msra.mxu0 0
    %818 = vmatprep.subr.bf16.mxu0 0
    %819 = vmatpush1.bf16.msra.mxu0 0
    %820 = vmatprep.subr.bf16.mxu0 0
    %821 = vmatpush1.bf16.msra.mxu0 0
    %822 = vmatprep.subr.bf16.mxu0 0
    %823 = vmatpush1.bf16.msra.mxu0 0
    %824 = vmatprep.subr.bf16.mxu0 0
    %825 = vmatpush1.bf16.msra.mxu0 0
    %826 = vmatprep.subr.bf16.mxu0 0
    %827 = vmatpush1.bf16.msra.mxu0 0
    %828 = vmatprep.subr.bf16.mxu0 0
    %829 = vmatpush1.bf16.msra.mxu0 0
    %830 = vmatprep.subr.bf16.mxu0 0
    %831 = vmatpush1.bf16.msra.mxu0 0
    %832 = vmatprep.subr.bf16.mxu0 0
    %833 = vmatpush1.bf16.msra.mxu0 0
    %834 = vmatprep.subr.bf16.mxu0 0
    %835 = vmatpush1.bf16.msra.mxu0 0
    %836 = vmatprep.subr.bf16.mxu0 0
    %837 = vmatpush1.bf16.msra.mxu0 0
    %838 = vmatprep.subr.bf16.mxu0 0
    %839 = vmatpush1.bf16.msra.mxu0 0
    %840 = vmatprep.mubr.bf16.mxu0 0
    %841 = vmatmul.mubr.bf16.gmra.mrb[0].mxu0 %v803
    %v842 = vpop.f32.mrb[0].mxu0
    %v843 = vadd.f32 0.0, %v842
    %v844 = vpop.f32.mrb[0].mxu0
    %v845 = vpop.f32.mrb[0].mxu0
    %v846 = vpop.f32.mrb[0].mxu0
    %847 = vdwg.mxu0
    %v849 = vsel %vm660, %v708, 0
    %v852 = vsel %vm712, %v459, 0
    %854 = vmatprep.subr.bf16.mxu0 0
    %855 = vmatpush1.bf16.msra.mxu0 %v852
    %856 = vmatprep.subr.bf16.mxu0 0
    %857 = vmatpush1.bf16.msra.mxu0 0
    %858 = vmatprep.subr.bf16.mxu0 0
    %859 = vmatpush1.bf16.msra.mxu0 0
    %860 = vmatprep.subr.bf16.mxu0 0
    %861 = vmatpush1.bf16.msra.mxu0 0
    %862 = vmatprep.subr.bf16.mxu0 0
    %863 = vmatpush1.bf16.msra.mxu0 0
    %864 = vmatprep.subr.bf16.mxu0 0
    %865 = vmatpush1.bf16.msra.mxu0 0
    %866 = vmatprep.subr.bf16.mxu0 0
    %867 = vmatpush1.bf16.msra.mxu0 0
    %868 = vmatprep.subr.bf16.mxu0 0
    %869 = vmatpush1.bf16.msra.mxu0 0
    %870 = vmatprep.subr.bf16.mxu0 0
    %871 = vmatpush1.bf16.msra.mxu0 0
    %872 = vmatprep.subr.bf16.mxu0 0
    %873 = vmatpush1.bf16.msra.mxu0 0
    %874 = vmatprep.subr.bf16.mxu0 0
    %875 = vmatpush1.bf16.msra.mxu0 0
    %876 = vmatprep.subr.bf16.mxu0 0
    %877 = vmatpush1.bf16.msra.mxu0 0
    %878 = vmatprep.subr.bf16.mxu0 0
    %879 = vmatpush1.bf16.msra.mxu0 0
    %880 = vmatprep.subr.bf16.mxu0 0
    %881 = vmatpush1.bf16.msra.mxu0 0
    %882 = vmatprep.subr.bf16.mxu0 0
    %883 = vmatpush1.bf16.msra.mxu0 0
    %884 = vmatprep.subr.bf16.mxu0 0
    %885 = vmatpush1.bf16.msra.mxu0 0
    %886 = vmatprep.mubr.bf16.mxu0 0
    %887 = vmatmul.mubr.bf16.gmra.mrb[0].mxu0 %v849
    %v888 = vpop.f32.mrb[0].mxu0
    %v889 = vadd.f32 0.0, %v888
    %v890 = vpop.f32.mrb[0].mxu0
    %v891 = vpop.f32.mrb[0].mxu0
    %v892 = vpop.f32.mrb[0].mxu0
    %893 = vdwg.mxu0
    %v894 = vpack.c.bf16 %v797, %v751
    %v895 = vpack.c.bf16 %v889, %v843
    %v896 = vunpack.c.l.bf16 %v116
    %v897 = vunpack.c.l.bf16 %v117
    %v898 = vunpack.c.l.bf16 %v118
    %v899 = vunpack.c.l.bf16 %v119
    %v900 = vld [vmem:[#allocation8] sm:$0xf]
    %v901 = vld [vmem:[#allocation8 + $0x4] sm:$0xf]
    %v902 = vld [vmem:[#allocation8 + $0x8] sm:$0xf]
    %v903 = vld [vmem:[#allocation8 + $0xc] sm:$0xf]
    %v904 = vld [vmem:[#allocation8 + $0x10] sm:$0xf]
    %v905 = vld [vmem:[#allocation8 + $0x14] sm:$0xf]
    %v906 = vld [vmem:[#allocation8 + $0x18] sm:$0xf]
    %v907 = vld [vmem:[#allocation8 + $0x1c] sm:$0xf]
    %v908 = vld [vmem:[#allocation8 + $0x20] sm:$0xf]
    %v909 = vld [vmem:[#allocation8 + $0x24] sm:$0xf]
    %v910 = vld [vmem:[#allocation8 + $0x28] sm:$0xf]
    %v911 = vld [vmem:[#allocation8 + $0x2c] sm:$0xf]
    %v912 = vld [vmem:[#allocation8 + $0x30] sm:$0xf]
    %v913 = vld [vmem:[#allocation8 + $0x34] sm:$0xf]
    %v914 = vld [vmem:[#allocation8 + $0x38] sm:$0xf]
    %v915 = vld [vmem:[#allocation8 + $0x3c] sm:$0xf]
    %v932 = vunpack.c.l.b16 %v900
    %v933 = vunpack.c.l.b16 %v901
    %v934 = vunpack.c.l.b16 %v902
    %v935 = vunpack.c.l.b16 %v903
    %v936 = vunpack.c.l.b16 %v904
    %v937 = vunpack.c.l.b16 %v905
    %v938 = vunpack.c.l.b16 %v906
    %v939 = vunpack.c.l.b16 %v907
    %v940 = vunpack.c.l.b16 %v908
    %v941 = vunpack.c.l.b16 %v909
    %v942 = vunpack.c.l.b16 %v910
    %v943 = vunpack.c.l.b16 %v911
    %v944 = vunpack.c.l.b16 %v912
    %v945 = vunpack.c.l.b16 %v913
    %v946 = vunpack.c.l.b16 %v914
    %v947 = vunpack.c.l.b16 %v915
    %v948 = vpack.c.b16 %v933, %v932
    %v949 = vpack.c.b16 %v935, %v934
    %v950 = vpack.c.b16 %v937, %v936
    %v951 = vpack.c.b16 %v939, %v938
    %v952 = vpack.c.b16 %v941, %v940
    %v953 = vpack.c.b16 %v943, %v942
    %v954 = vpack.c.b16 %v945, %v944
    %v955 = vpack.c.b16 %v947, %v946
    %964 = vmatprep.subr.bf16.mxu0 0
    %965 = vmatpush1.bf16.msra.mxu0 %v948
    %966 = vmatprep.subr.bf16.mxu0 0
    %967 = vmatpush1.bf16.msra.mxu0 %v949
    %968 = vmatprep.subr.bf16.mxu0 0
    %969 = vmatpush1.bf16.msra.mxu0 %v950
    %970 = vmatprep.subr.bf16.mxu0 0
    %971 = vmatpush1.bf16.msra.mxu0 %v951
    %972 = vmatprep.subr.bf16.mxu0 0
    %973 = vmatpush1.bf16.msra.mxu0 %v952
    %974 = vmatprep.subr.bf16.mxu0 0
    %975 = vmatpush1.bf16.msra.mxu0 %v953
    %976 = vmatprep.subr.bf16.mxu0 0
    %977 = vmatpush1.bf16.msra.mxu0 %v954
    %978 = vmatprep.subr.bf16.mxu0 0
    %979 = vmatpush1.bf16.msra.mxu0 %v955
    %980 = vmatprep.subr.bf16.mxu0 0
    %981 = vmatpush1.bf16.msra.mxu0 0
    %982 = vmatprep.subr.bf16.mxu0 0
    %983 = vmatpush1.bf16.msra.mxu0 0
    %984 = vmatprep.subr.bf16.mxu0 0
    %985 = vmatpush1.bf16.msra.mxu0 0
    %986 = vmatprep.subr.bf16.mxu0 0
    %987 = vmatpush1.bf16.msra.mxu0 0
    %988 = vmatprep.subr.bf16.mxu0 0
    %989 = vmatpush1.bf16.msra.mxu0 0
    %990 = vmatprep.subr.bf16.mxu0 0
    %991 = vmatpush1.bf16.msra.mxu0 0
    %992 = vmatprep.subr.bf16.mxu0 0
    %993 = vmatpush1.bf16.msra.mxu0 0
    %994 = vmatprep.subr.bf16.mxu0 0
    %995 = vmatpush1.bf16.msra.mxu0 0
    %996 = vmatprep.mubr.bf16.mxu0 0
    %997 = vmatmul.mubr.bf16.gmra.mrb[0].mxu0 %v894
    %v998 = vpop.f32.mrb[0].mxu0
    %v999 = vadd.f32 0.0, %v998
    %v1000 = vpop.f32.mrb[0].mxu0
    %v1001 = vpop.f32.mrb[0].mxu0
    %v1002 = vadd.f32 0.0, %v1001
    %v1003 = vpop.f32.mrb[0].mxu0
    %1004 = vmatprep.mubr.bf16.mxu0 0
    %1005 = vmatmul.mubr.bf16.gmra.mrb[0].mxu0 %v895
    %v1006 = vpop.f32.mrb[0].mxu0
    %v1007 = vadd.f32 0.0, %v1006
    %v1008 = vpop.f32.mrb[0].mxu0
    %v1009 = vpop.f32.mrb[0].mxu0
    %v1010 = vadd.f32 0.0, %v1009
    %v1011 = vpop.f32.mrb[0].mxu0
    %1012 = vdwg.mxu0
    %v1013 = vadd.f32 %v896, %v999
    %v1014 = vadd.f32 %v897, %v1002
    %v1015 = vadd.f32 %v898, %v1007
    %v1016 = vadd.f32 %v899, %v1010
    %v1017 = vlaneseq
    %v1018 = vshrl.u32 %v1017, 7
    %v1019 = vsub.s32 0, %v1018
    %v1020 = vrot.slane %v124, %v1019
    %v1021 = vadd.f32 %v1013, %v1020
    %v1022 = vadd.f32 %v1014, %v1020
    %v1023 = vadd.f32 %v1015, %v1020
    %v1024 = vadd.f32 %v1016, %v1020
    %1025 = vadd.xlane.f32.xlu0 %v1021
    %v1026 = vpop.xlane.xlu0 %1025
    %1027 = vadd.xlane.f32.xlu0 %v1022
    %v1028 = vpop.xlane.xlu0 %1027
    %1029 = vadd.xlane.f32.xlu0 %v1023
    %v1030 = vpop.xlane.xlu0 %1029
    %1031 = vadd.xlane.f32.xlu0 %v1024
    %v1032 = vpop.xlane.xlu0 %1031
    %v1033 = vrcp.pop 128.0
    %v1034 = vmul.f32 %v1026, %v1033
    %v1035 = vmul.f32 %v1028, %v1033
    %v1036 = vmul.f32 %v1030, %v1033
    %v1037 = vmul.f32 %v1032, %v1033
    %v1038 = vsub.f32 %v1021, %v1034
    %v1039 = vsub.f32 %v1022, %v1035
    %v1040 = vsub.f32 %v1023, %v1036
    %v1041 = vsub.f32 %v1024, %v1037
    %v1042 = vmul.f32 %v1038, %v1038
    %v1043 = vmul.f32 %v1039, %v1039
    %v1044 = vmul.f32 %v1040, %v1040
    %v1045 = vmul.f32 %v1041, %v1041
    %1046 = vadd.xlane.f32.xlu0 %v1042
    %v1047 = vpop.xlane.xlu0 %1046
    %1048 = vadd.xlane.f32.xlu0 %v1043
    %v1049 = vpop.xlane.xlu0 %1048
    %1050 = vadd.xlane.f32.xlu0 %v1044
    %v1051 = vpop.xlane.xlu0 %1050
    %1052 = vadd.xlane.f32.xlu0 %v1045
    %v1053 = vpop.xlane.xlu0 %1052
    %v1054 = vmul.f32 %v1047, %v1033
    %v1055 = vmul.f32 %v1049, %v1033
    %v1056 = vmul.f32 %v1051, %v1033
    %v1057 = vmul.f32 %v1053, %v1033
    %v1058 = vadd.f32 %v1054, 1e-12
    %v1059 = vadd.f32 %v1055, 1e-12
    %v1060 = vadd.f32 %v1056, 1e-12
    %v1061 = vadd.f32 %v1057, 1e-12
    %v1062 = vrsqrt.pop %v1058
    %v1063 = vrsqrt.pop %v1059
    %v1064 = vrsqrt.pop %v1060
    %v1065 = vrsqrt.pop %v1061
    %v1066 = vmul.f32 %v1038, %v1062
    %v1067 = vmul.f32 %v1039, %v1063
    %v1068 = vmul.f32 %v1040, %v1064
    %v1069 = vmul.f32 %v1041, %v1065
    %v1070 = vlaneseq
    %v1071 = vshrl.u32 %v1070, 7
    %v1072 = vsub.s32 1, %v1071
    %v1073 = vrot.slane %v124, %v1072
    %v1074 = vmul.f32 %v1066, %v1073
    %v1075 = vmul.f32 %v1067, %v1073
    %v1076 = vmul.f32 %v1068, %v1073
    %v1077 = vmul.f32 %v1069, %v1073
    %v1078 = vlaneseq
    %v1079 = vshrl.u32 %v1078, 7
    %v1080 = vsub.s32 2, %v1079
    %v1081 = vrot.slane %v124, %v1080
    %v1082 = vadd.f32 %v1074, %v1081
    %v1083 = vadd.f32 %v1075, %v1081
    %v1084 = vadd.f32 %v1076, %v1081
    %v1085 = vadd.f32 %v1077, %v1081
    %v1086 = vpack.c.bf16 %v1083, %v1082
    %v1087 = vpack.c.bf16 %v1085, %v1084
    %v1088 = vld [vmem:[#allocation10] sm:$0xff]
    %v1089 = vld [vmem:[#allocation10 + $0x8] sm:$0xff]
    %v1090 = vld [vmem:[#allocation10 + $0x10] sm:$0xff]
    %v1091 = vld [vmem:[#allocation10 + $0x18] sm:$0xff]
    %v1092 = vld [vmem:[#allocation10 + $0x20] sm:$0xff]
    %v1093 = vld [vmem:[#allocation10 + $0x28] sm:$0xff]
    %v1094 = vld [vmem:[#allocation10 + $0x30] sm:$0xff]
    %v1095 = vld [vmem:[#allocation10 + $0x38] sm:$0xff]
    %v1096 = vld [vmem:[#allocation10 + $0x40] sm:$0xff]
    %v1097 = vld [vmem:[#allocation10 + $0x48] sm:$0xff]
    %v1098 = vld [vmem:[#allocation10 + $0x50] sm:$0xff]
    %v1099 = vld [vmem:[#allocation10 + $0x58] sm:$0xff]
    %v1100 = vld [vmem:[#allocation10 + $0x60] sm:$0xff]
    %v1101 = vld [vmem:[#allocation10 + $0x68] sm:$0xff]
    %v1102 = vld [vmem:[#allocation10 + $0x70] sm:$0xff]
    %v1103 = vld [vmem:[#allocation10 + $0x78] sm:$0xff]
    %v1104 = vld [vmem:[%s6] sm:$0x3]
    %v1106 = vlaneseq
    %v1107 = vshrl.u32 %v1106, 7
    %v1108 = vsub.s32 0, %v1107
    %v1109 = vrot.slane %v1104, %v1108
    %v1110 = vlaneseq
    %v1111 = vshrl.u32 %v1110, 7
    %v1112 = vsub.s32 1, %v1111
    %v1113 = vrot.slane %v1104, %v1112
    %v1132 = vunpack.c.l.b16 %v1088
    %v1133 = vunpack.c.h.b16 %v1088
    %v1134 = vunpack.c.l.b16 %v1089
    %v1135 = vunpack.c.h.b16 %v1089
    %v1136 = vunpack.c.l.b16 %v1090
    %v1137 = vunpack.c.h.b16 %v1090
    %v1138 = vunpack.c.l.b16 %v1091
    %v1139 = vunpack.c.h.b16 %v1091
    %v1140 = vunpack.c.l.b16 %v1092
    %v1141 = vunpack.c.h.b16 %v1092
    %v1142 = vunpack.c.l.b16 %v1093
    %v1143 = vunpack.c.h.b16 %v1093
    %v1144 = vunpack.c.l.b16 %v1094
    %v1145 = vunpack.c.h.b16 %v1094
    %v1146 = vunpack.c.l.b16 %v1095
    %v1147 = vunpack.c.h.b16 %v1095
    %v1148 = vunpack.c.l.b16 %v1096
    %v1149 = vunpack.c.h.b16 %v1096
    %v1150 = vunpack.c.l.b16 %v1097
    %v1151 = vunpack.c.h.b16 %v1097
    %v1152 = vunpack.c.l.b16 %v1098
    %v1153 = vunpack.c.h.b16 %v1098
    %v1154 = vunpack.c.l.b16 %v1099
    %v1155 = vunpack.c.h.b16 %v1099
    %v1156 = vunpack.c.l.b16 %v1100
    %v1157 = vunpack.c.h.b16 %v1100
    %v1158 = vunpack.c.l.b16 %v1101
    %v1159 = vunpack.c.h.b16 %v1101
    %v1160 = vunpack.c.l.b16 %v1102
    %v1161 = vunpack.c.h.b16 %v1102
    %v1162 = vunpack.c.l.b16 %v1103
    %v1163 = vunpack.c.h.b16 %v1103
    %v1164 = vpack.c.b16 %v1134, %v1132
    %v1165 = vpack.c.b16 %v1135, %v1133
    %v1166 = vpack.c.b16 %v1138, %v1136
    %v1167 = vpack.c.b16 %v1139, %v1137
    %v1168 = vpack.c.b16 %v1142, %v1140
    %v1169 = vpack.c.b16 %v1143, %v1141
    %v1170 = vpack.c.b16 %v1146, %v1144
    %v1171 = vpack.c.b16 %v1147, %v1145
    %v1172 = vpack.c.b16 %v1150, %v1148
    %v1173 = vpack.c.b16 %v1151, %v1149
    %v1174 = vpack.c.b16 %v1154, %v1152
    %v1175 = vpack.c.b16 %v1155, %v1153
    %v1176 = vpack.c.b16 %v1158, %v1156
    %v1177 = vpack.c.b16 %v1159, %v1157
    %v1178 = vpack.c.b16 %v1162, %v1160
    %v1179 = vpack.c.b16 %v1163, %v1161
    %1196 = vmatprep.subr.bf16.mxu0 %v1165
    %1197 = vmatpush1.bf16.msra.mxu0 %v1164
    %1198 = vmatprep.subr.bf16.mxu0 %v1167
    %1199 = vmatpush1.bf16.msra.mxu0 %v1166
    %1200 = vmatprep.subr.bf16.mxu0 %v1169
    %1201 = vmatpush1.bf16.msra.mxu0 %v1168
    %1202 = vmatprep.subr.bf16.mxu0 %v1171
    %1203 = vmatpush1.bf16.msra.mxu0 %v1170
    %1204 = vmatprep.subr.bf16.mxu0 %v1173
    %1205 = vmatpush1.bf16.msra.mxu0 %v1172
    %1206 = vmatprep.subr.bf16.mxu0 %v1175
    %1207 = vmatpush1.bf16.msra.mxu0 %v1174
    %1208 = vmatprep.subr.bf16.mxu0 %v1177
    %1209 = vmatpush1.bf16.msra.mxu0 %v1176
    %1210 = vmatprep.subr.bf16.mxu0 %v1179
    %1211 = vmatpush1.bf16.msra.mxu0 %v1178
    %1212 = vmatprep.subr.bf16.mxu0 0
    %1213 = vmatpush1.bf16.msra.mxu0 0
    %1214 = vmatprep.subr.bf16.mxu0 0
    %1215 = vmatpush1.bf16.msra.mxu0 0
    %1216 = vmatprep.subr.bf16.mxu0 0
    %1217 = vmatpush1.bf16.msra.mxu0 0
    %1218 = vmatprep.subr.bf16.mxu0 0
    %1219 = vmatpush1.bf16.msra.mxu0 0
    %1220 = vmatprep.subr.bf16.mxu0 0
    %1221 = vmatpush1.bf16.msra.mxu0 0
    %1222 = vmatprep.subr.bf16.mxu0 0
    %1223 = vmatpush1.bf16.msra.mxu0 0
    %1224 = vmatprep.subr.bf16.mxu0 0
    %1225 = vmatpush1.bf16.msra.mxu0 0
    %1226 = vmatprep.subr.bf16.mxu0 0
    %1227 = vmatpush1.bf16.msra.mxu0 0
    %1228 = vmatprep.mubr.bf16.mxu0 0
    %1229 = vmatmul.mubr.bf16.gmra.mrb[0].mxu0 %v1086
    %v1230 = vpop.f32.mrb[0].mxu0
    %v1231 = vadd.f32 %v1109, %v1230
    %v1232 = vpop.f32.mrb[0].mxu0
    %v1233 = vadd.f32 %v1113, %v1232
    %v1234 = vpop.f32.mrb[0].mxu0
    %v1235 = vadd.f32 %v1109, %v1234
    %v1236 = vpop.f32.mrb[0].mxu0
    %v1237 = vadd.f32 %v1113, %v1236
    %1238 = vmatprep.mubr.bf16.mxu0 0
    %1239 = vmatmul.mubr.bf16.gmra.mrb[0].mxu0 %v1087
    %v1240 = vpop.f32.mrb[0].mxu0
    %v1241 = vadd.f32 %v1109, %v1240
    %v1242 = vpop.f32.mrb[0].mxu0
    %v1243 = vadd.f32 %v1113, %v1242
    %v1244 = vpop.f32.mrb[0].mxu0
    %v1245 = vadd.f32 %v1109, %v1244
    %v1246 = vpop.f32.mrb[0].mxu0
    %v1247 = vadd.f32 %v1113, %v1246
    %1248 = vdwg.mxu0
    %v1249 = vmul.f32 %v1231, %v1231
    %v1250 = vmul.f32 %v1233, %v1233
    %v1251 = vmul.f32 %v1235, %v1235
    %v1252 = vmul.f32 %v1237, %v1237
    %v1253 = vmul.f32 %v1241, %v1241
    %v1254 = vmul.f32 %v1243, %v1243
    %v1255 = vmul.f32 %v1245, %v1245
    %v1256 = vmul.f32 %v1247, %v1247
    %v1257 = vmul.f32 %v1231, %v1249
    %v1258 = vmul.f32 %v1233, %v1250
    %v1259 = vmul.f32 %v1235, %v1251
    %v1260 = vmul.f32 %v1237, %v1252
    %v1261 = vmul.f32 %v1241, %v1253
    %v1262 = vmul.f32 %v1243, %v1254
    %v1263 = vmul.f32 %v1245, %v1255
    %v1264 = vmul.f32 %v1247, %v1256
    %v1265 = vmul.f32 %v1257, 0.044715
    %v1266 = vmul.f32 %v1258, 0.044715
    %v1267 = vmul.f32 %v1259, 0.044715
    %v1268 = vmul.f32 %v1260, 0.044715
    %v1269 = vmul.f32 %v1261, 0.044715
    %v1270 = vmul.f32 %v1262, 0.044715
    %v1271 = vmul.f32 %v1263, 0.044715
    %v1272 = vmul.f32 %v1264, 0.044715
    %v1273 = vadd.f32 %v1231, %v1265
    %v1274 = vadd.f32 %v1233, %v1266
    %v1275 = vadd.f32 %v1235, %v1267
    %v1276 = vadd.f32 %v1237, %v1268
    %v1277 = vadd.f32 %v1241, %v1269
    %v1278 = vadd.f32 %v1243, %v1270
    %v1279 = vadd.f32 %v1245, %v1271
    %v1280 = vadd.f32 %v1247, %v1272
    %v1281 = vmul.f32 %v1273, 0.7978846
    %v1282 = vmul.f32 %v1274, 0.7978846
    %v1283 = vmul.f32 %v1275, 0.7978846
    %v1284 = vmul.f32 %v1276, 0.7978846
    %v1285 = vmul.f32 %v1277, 0.7978846
    %v1286 = vmul.f32 %v1278, 0.7978846
    %v1287 = vmul.f32 %v1279, 0.7978846
    %v1288 = vmul.f32 %v1280, 0.7978846
    %v1289 = vtanh.pop %v1281
    %v1290 = vtanh.pop %v1282
    %v1291 = vtanh.pop %v1283
    %v1292 = vtanh.pop %v1284
    %v1293 = vtanh.pop %v1285
    %v1294 = vtanh.pop %v1286
    %v1295 = vtanh.pop %v1287
    %v1296 = vtanh.pop %v1288
    %v1297 = vadd.f32 %v1289, 1.0
    %v1298 = vadd.f32 %v1290, 1.0
    %v1299 = vadd.f32 %v1291, 1.0
    %v1300 = vadd.f32 %v1292, 1.0
    %v1301 = vadd.f32 %v1293, 1.0
    %v1302 = vadd.f32 %v1294, 1.0
    %v1303 = vadd.f32 %v1295, 1.0
    %v1304 = vadd.f32 %v1296, 1.0
    %v1305 = vmul.f32 %v1297, 0.5
    %v1306 = vmul.f32 %v1298, 0.5
    %v1307 = vmul.f32 %v1299, 0.5
    %v1308 = vmul.f32 %v1300, 0.5
    %v1309 = vmul.f32 %v1301, 0.5
    %v1310 = vmul.f32 %v1302, 0.5
    %v1311 = vmul.f32 %v1303, 0.5
    %v1312 = vmul.f32 %v1304, 0.5
    %v1313 = vmul.f32 %v1231, %v1305
    %v1314 = vmul.f32 %v1233, %v1306
    %v1315 = vmul.f32 %v1235, %v1307
    %v1316 = vmul.f32 %v1237, %v1308
    %v1317 = vmul.f32 %v1241, %v1309
    %v1318 = vmul.f32 %v1243, %v1310
    %v1319 = vmul.f32 %v1245, %v1311
    %v1320 = vmul.f32 %v1247, %v1312
    %v1321 = vpack.c.bf16 %v1315, %v1313
    %v1322 = vpack.c.bf16 %v1316, %v1314
    %v1323 = vpack.c.bf16 %v1319, %v1317
    %v1324 = vpack.c.bf16 %v1320, %v1318
    %v1325 = vld [vmem:[#allocation11] sm:$0xf]
    %v1326 = vld [vmem:[#allocation11 + $0x4] sm:$0xf]
    %v1327 = vld [vmem:[#allocation11 + $0x8] sm:$0xf]
    %v1328 = vld [vmem:[#allocation11 + $0xc] sm:$0xf]
    %v1329 = vld [vmem:[#allocation11 + $0x10] sm:$0xf]
    %v1330 = vld [vmem:[#allocation11 + $0x14] sm:$0xf]
    %v1331 = vld [vmem:[#allocation11 + $0x18] sm:$0xf]
    %v1332 = vld [vmem:[#allocation11 + $0x1c] sm:$0xf]
    %v1333 = vld [vmem:[#allocation11 + $0x20] sm:$0xf]
    %v1334 = vld [vmem:[#allocation11 + $0x24] sm:$0xf]
    %v1335 = vld [vmem:[#allocation11 + $0x28] sm:$0xf]
    %v1336 = vld [vmem:[#allocation11 + $0x2c] sm:$0xf]
    %v1337 = vld [vmem:[#allocation11 + $0x30] sm:$0xf]
    %v1338 = vld [vmem:[#allocation11 + $0x34] sm:$0xf]
    %v1339 = vld [vmem:[#allocation11 + $0x38] sm:$0xf]
    %v1340 = vld [vmem:[#allocation11 + $0x3c] sm:$0xf]
    %v1341 = vld [vmem:[#allocation11 + $0x40] sm:$0xf]
    %v1342 = vld [vmem:[#allocation11 + $0x44] sm:$0xf]
    %v1343 = vld [vmem:[#allocation11 + $0x48] sm:$0xf]
    %v1344 = vld [vmem:[#allocation11 + $0x4c] sm:$0xf]
    %v1345 = vld [vmem:[#allocation11 + $0x50] sm:$0xf]
    %v1346 = vld [vmem:[#allocation11 + $0x54] sm:$0xf]
    %v1347 = vld [vmem:[#allocation11 + $0x58] sm:$0xf]
    %v1348 = vld [vmem:[#allocation11 + $0x5c] sm:$0xf]
    %v1349 = vld [vmem:[#allocation11 + $0x60] sm:$0xf]
    %v1350 = vld [vmem:[#allocation11 + $0x64] sm:$0xf]
    %v1351 = vld [vmem:[#allocation11 + $0x68] sm:$0xf]
    %v1352 = vld [vmem:[#allocation11 + $0x6c] sm:$0xf]
    %v1353 = vld [vmem:[#allocation11 + $0x70] sm:$0xf]
    %v1354 = vld [vmem:[#allocation11 + $0x74] sm:$0xf]
    %v1355 = vld [vmem:[#allocation11 + $0x78] sm:$0xf]
    %v1356 = vld [vmem:[#allocation11 + $0x7c] sm:$0xf]
    %v1357 = vlaneseq
    %v1358 = vshrl.u32 %v1357, 7
    %v1359 = vsub.s32 3, %v1358
    %v1360 = vrot.slane %v124, %v1359
    %v1393 = vunpack.c.l.b16 %v1325
    %v1394 = vunpack.c.l.b16 %v1326
    %v1395 = vunpack.c.l.b16 %v1327
    %v1396 = vunpack.c.l.b16 %v1328
    %v1397 = vunpack.c.l.b16 %v1329
    %v1398 = vunpack.c.l.b16 %v1330
    %v1399 = vunpack.c.l.b16 %v1331
    %v1400 = vunpack.c.l.b16 %v1332
    %v1401 = vunpack.c.l.b16 %v1333
    %v1402 = vunpack.c.l.b16 %v1334
    %v1403 = vunpack.c.l.b16 %v1335
    %v1404 = vunpack.c.l.b16 %v1336
    %v1405 = vunpack.c.l.b16 %v1337
    %v1406 = vunpack.c.l.b16 %v1338
    %v1407 = vunpack.c.l.b16 %v1339
    %v1408 = vunpack.c.l.b16 %v1340
    %v1409 = vunpack.c.l.b16 %v1341
    %v1410 = vunpack.c.l.b16 %v1342
    %v1411 = vunpack.c.l.b16 %v1343
    %v1412 = vunpack.c.l.b16 %v1344
    %v1413 = vunpack.c.l.b16 %v1345
    %v1414 = vunpack.c.l.b16 %v1346
    %v1415 = vunpack.c.l.b16 %v1347
    %v1416 = vunpack.c.l.b16 %v1348
    %v1417 = vunpack.c.l.b16 %v1349
    %v1418 = vunpack.c.l.b16 %v1350
    %v1419 = vunpack.c.l.b16 %v1351
    %v1420 = vunpack.c.l.b16 %v1352
    %v1421 = vunpack.c.l.b16 %v1353
    %v1422 = vunpack.c.l.b16 %v1354
    %v1423 = vunpack.c.l.b16 %v1355
    %v1424 = vunpack.c.l.b16 %v1356
    %v1425 = vpack.c.b16 %v1394, %v1393
    %v1426 = vpack.c.b16 %v1396, %v1395
    %v1427 = vpack.c.b16 %v1398, %v1397
    %v1428 = vpack.c.b16 %v1400, %v1399
    %v1429 = vpack.c.b16 %v1402, %v1401
    %v1430 = vpack.c.b16 %v1404, %v1403
    %v1431 = vpack.c.b16 %v1406, %v1405
    %v1432 = vpack.c.b16 %v1408, %v1407
    %v1433 = vpack.c.b16 %v1410, %v1409
    %v1434 = vpack.c.b16 %v1412, %v1411
    %v1435 = vpack.c.b16 %v1414, %v1413
    %v1436 = vpack.c.b16 %v1416, %v1415
    %v1437 = vpack.c.b16 %v1418, %v1417
    %v1438 = vpack.c.b16 %v1420, %v1419
    %v1439 = vpack.c.b16 %v1422, %v1421
    %v1440 = vpack.c.b16 %v1424, %v1423
    %1457 = vmatprep.subr.bf16.mxu0 0
    %1458 = vmatpush1.bf16.msra.mxu0 %v1425
    %1459 = vmatprep.subr.bf16.mxu0 0
    %1460 = vmatpush1.bf16.msra.mxu0 %v1426
    %1461 = vmatprep.subr.bf16.mxu0 0
    %1462 = vmatpush1.bf16.msra.mxu0 %v1427
    %1463 = vmatprep.subr.bf16.mxu0 0
    %1464 = vmatpush1.bf16.msra.mxu0 %v1428
    %1465 = vmatprep.subr.bf16.mxu0 0
    %1466 = vmatpush1.bf16.msra.mxu0 %v1429
    %1467 = vmatprep.subr.bf16.mxu0 0
    %1468 = vmatpush1.bf16.msra.mxu0 %v1430
    %1469 = vmatprep.subr.bf16.mxu0 0
    %1470 = vmatpush1.bf16.msra.mxu0 %v1431
    %1471 = vmatprep.subr.bf16.mxu0 0
    %1472 = vmatpush1.bf16.msra.mxu0 %v1432
    %1473 = vmatprep.subr.bf16.mxu0 0
    %1474 = vmatpush1.bf16.msra.mxu0 %v1433
    %1475 = vmatprep.subr.bf16.mxu0 0
    %1476 = vmatpush1.bf16.msra.mxu0 %v1434
    %1477 = vmatprep.subr.bf16.mxu0 0
    %1478 = vmatpush1.bf16.msra.mxu0 %v1435
    %1479 = vmatprep.subr.bf16.mxu0 0
    %1480 = vmatpush1.bf16.msra.mxu0 %v1436
    %1481 = vmatprep.subr.bf16.mxu0 0
    %1482 = vmatpush1.bf16.msra.mxu0 %v1437
    %1483 = vmatprep.subr.bf16.mxu0 0
    %1484 = vmatpush1.bf16.msra.mxu0 %v1438
    %1485 = vmatprep.subr.bf16.mxu0 0
    %1486 = vmatpush1.bf16.msra.mxu0 %v1439
    %1487 = vmatprep.subr.bf16.mxu0 0
    %1488 = vmatpush1.bf16.msra.mxu0 %v1440
    %1489 = vmatprep.mubr.bf16.mxu0 %v1322
    %1490 = vmatmul.mubr.bf16.gmra.mrb[0].mxu0 %v1321
    %v1491 = vpop.f32.mrb[0].mxu0
    %v1492 = vadd.f32 %v1360, %v1491
    %v1493 = vpop.f32.mrb[0].mxu0
    %v1494 = vpop.f32.mrb[0].mxu0
    %v1495 = vadd.f32 %v1360, %v1494
    %v1496 = vpop.f32.mrb[0].mxu0
    %1497 = vmatprep.mubr.bf16.mxu0 %v1324
    %1498 = vmatmul.mubr.bf16.gmra.mrb[0].mxu0 %v1323
    %v1499 = vpop.f32.mrb[0].mxu0
    %v1500 = vadd.f32 %v1360, %v1499
    %v1501 = vpop.f32.mrb[0].mxu0
    %v1502 = vpop.f32.mrb[0].mxu0
    %v1503 = vadd.f32 %v1360, %v1502
    %v1504 = vpop.f32.mrb[0].mxu0
    %1505 = vdwg.mxu0
    %v1506 = vadd.f32 %v1082, %v1492
    %v1507 = vadd.f32 %v1083, %v1495
    %v1508 = vadd.f32 %v1084, %v1500
    %v1509 = vadd.f32 %v1085, %v1503
    %1510 = vadd.xlane.f32.xlu0 %v1506
    %v1511 = vpop.xlane.xlu0 %1510
    %1512 = vadd.xlane.f32.xlu0 %v1507
    %v1513 = vpop.xlane.xlu0 %1512
    %1514 = vadd.xlane.f32.xlu0 %v1508
    %v1515 = vpop.xlane.xlu0 %1514
    %1516 = vadd.xlane.f32.xlu0 %v1509
    %v1517 = vpop.xlane.xlu0 %1516
    %v1518 = vmul.f32 %v1511, %v1033
    %v1519 = vmul.f32 %v1513, %v1033
    %v1520 = vmul.f32 %v1515, %v1033
    %v1521 = vmul.f32 %v1517, %v1033
    %v1522 = vsub.f32 %v1506, %v1518
    %v1523 = vsub.f32 %v1507, %v1519
    %v1524 = vsub.f32 %v1508, %v1520
    %v1525 = vsub.f32 %v1509, %v1521
    %v1526 = vmul.f32 %v1522, %v1522
    %v1527 = vmul.f32 %v1523, %v1523
    %v1528 = vmul.f32 %v1524, %v1524
    %v1529 = vmul.f32 %v1525, %v1525
    %1530 = vadd.xlane.f32.xlu0 %v1526
    %v1531 = vpop.xlane.xlu0 %1530
    %1532 = vadd.xlane.f32.xlu0 %v1527
    %v1533 = vpop.xlane.xlu0 %1532
    %1534 = vadd.xlane.f32.xlu0 %v1528
    %v1535 = vpop.xlane.xlu0 %1534
    %1536 = vadd.xlane.f32.xlu0 %v1529
    %v1537 = vpop.xlane.xlu0 %1536
    %v1538 = vmul.f32 %v1531, %v1033
    %v1539 = vmul.f32 %v1533, %v1033
    %v1540 = vmul.f32 %v1535, %v1033
    %v1541 = vmul.f32 %v1537, %v1033
    %v1542 = vadd.f32 %v1538, 1e-12
    %v1543 = vadd.f32 %v1539, 1e-12
    %v1544 = vadd.f32 %v1540, 1e-12
    %v1545 = vadd.f32 %v1541, 1e-12
    %v1546 = vrsqrt.pop %v1542
    %v1547 = vrsqrt.pop %v1543
    %v1548 = vrsqrt.pop %v1544
    %v1549 = vrsqrt.pop %v1545
    %v1550 = vmul.f32 %v1522, %v1546
    %v1551 = vmul.f32 %v1523, %v1547
    %v1552 = vmul.f32 %v1524, %v1548
    %v1553 = vmul.f32 %v1525, %v1549
    %v1554 = vlaneseq
    %v1555 = vshrl.u32 %v1554, 7
    %v1556 = vsub.s32 4, %v1555
    %v1557 = vrot.slane %v124, %v1556
    %v1558 = vmul.f32 %v1550, %v1557
    %v1559 = vmul.f32 %v1551, %v1557
    %v1560 = vmul.f32 %v1552, %v1557
    %v1561 = vmul.f32 %v1553, %v1557
    %v1562 = vlaneseq
    %v1563 = vshrl.u32 %v1562, 7
    %v1564 = vsub.s32 5, %v1563
    %v1565 = vrot.slane %v124, %v1564
    %v1566 = vadd.f32 %v1558, %v1565
    %v1567 = vadd.f32 %v1559, %v1565
    %v1568 = vadd.f32 %v1560, %v1565
    %v1569 = vadd.f32 %v1561, %v1565
    %v1570 = vpack.c.bf16 %v1566, %v1566
    %v1571 = vpack.c.bf16 %v1567, %v1567
    %v1572 = vpack.c.bf16 %v1568, %v1568
    %v1573 = vpack.c.bf16 %v1569, %v1569
    %1574 = vst [vmem:[#allocation13] sm:$0xf] %v1570
    %1575 = vst [vmem:[#allocation13 + $0x4] sm:$0xf] %v1571
    %1576 = vst [vmem:[#allocation13 + $0x8] sm:$0xf] %v1572
    %1577 = vst [vmem:[#allocation13 + $0xc] sm:$0xf] %v1573
    // Predicated region
    $region62: #{tpu_custom_call.1} parent=1 // pred_check
      _
    $region63: #{tpu_custom_call.1} parent=1 // pred_check_branch
      %1579 = sbr.rel (0) target = $region65
    $region64: #{tpu_custom_call.1} parent=1 // pred_region
      %s1581 = ssub.s32 256, 256
      %1582 = vsyncadd [#allocation4], %s1581
      %s1583 = sshll.u32 [#allocation13], 4
      %s1584 = int_to_ptr.vmem [resolvable:$true] %s1583
      %1589 = dma.vmem_to_hbm [thread:$0]  %s1584, 256, %s9, [#allocation4], 64, 64, 4
    $region65: #{tpu_custom_call.1} parent=1 // pred_fallthru
      _
    // Predicated region
    $region66: #{tpu_custom_call.1} parent=1 // pred_check
      _
    $region67: #{tpu_custom_call.1} parent=1 // pred_check_branch
      %1591 = sbr.rel (0) target = $region69
    $region68: #{tpu_custom_call.1} parent=1 // pred_region
      %1592 = dma.done [#allocation4], 256
    $region69: #{tpu_custom_call.1} parent=1 // pred_fallthru
      _
    %1593 = vsyncpa [#allocation3], 1
    %1594 = vsyncpa [#allocation6], 1
    %1595 = vsyncpa [#allocation9], 1
    %1596 = vsyncpa [#allocation12], 1
    %1597 = vsyncpa [#allocation4], 1

</llo_original>
